<compile_context>
chip_gen: v7x
topology: tpu7x:2x2x1
jax: 0.10.0
libtpu: 0.0.40
codegen_flags: <defaults>
</compile_context>

<pallas_src>
import functools
import numpy as np

import jax
import jax.numpy as jnp
from jax.experimental import pallas as pl
from jax.experimental.pallas import tpu as pltpu

EPS = 1e-5


# ----------------------------------------------------------------------------
# Trunk kernel: convT1 -> BN1 -> ReLU -> convT2 -> BN2 -> ReLU -> convT3 (+bias),
# then pre-gather the per-tile interpolation windows for the upsample kernel.
# All operands are tiny and live fully in VMEM (single grid point).
# ----------------------------------------------------------------------------
def _trunk_kernel(x_ref,
                  w1_ref, b1_ref, g1_ref, be1_ref, s1_ref, s1t_ref,
                  w2_ref, b2_ref, g2_ref, be2_ref, s2_ref, s2t_ref,
                  w3_ref, b3_ref,
                  ow_ref, *, n1, n2, bases, window):
    def bn_relu(h, s_ref, st_ref, g_ref, be_ref, n):
        # per-channel training-mode BatchNorm1d statistics via selection matmuls
        per_row = jnp.dot(h, s_ref[...], preferred_element_type=jnp.float32)    # (B, C)
        mean = jnp.sum(per_row, axis=0, keepdims=True) / n                       # (1, C)
        mean_f = jnp.dot(mean, st_ref[...], preferred_element_type=jnp.float32)  # (1, L*C)
        centered = h - mean_f                                                    # two-pass var
        per_row_sq = jnp.dot(centered * centered, s_ref[...],
                             preferred_element_type=jnp.float32)
        var = jnp.sum(per_row_sq, axis=0, keepdims=True) / n                     # biased var
        inv_std = jax.lax.rsqrt(var + EPS)
        inv_f = jnp.dot(inv_std, st_ref[...], preferred_element_type=jnp.float32)
        return jnp.maximum(centered * inv_f * g_ref[...] + be_ref[...], 0.0)

    x = x_ref[...]
    h1 = jnp.dot(x, w1_ref[...], preferred_element_type=jnp.float32) + b1_ref[...]
    h1 = bn_relu(h1, s1_ref, s1t_ref, g1_ref, be1_ref, n1)
    h2 = jnp.dot(h1, w2_ref[...], preferred_element_type=jnp.float32) + b2_ref[...]
    h2 = bn_relu(h2, s2_ref, s2t_ref, g2_ref, be2_ref, n2)
    h3 = jnp.dot(h2, w3_ref[...], preferred_element_type=jnp.float32) + b3_ref[...]  # (B, L3)

    # Pre-gather the window each upsample tile needs (bases are trace-time Python
    # ints -> purely static slices; no dynamic lane slicing anywhere).
    for i, base in enumerate(bases):
        ow_ref[i] = h3[:, base:base + window]


# ----------------------------------------------------------------------------
# Upsample kernel: nn.Upsample(size=661500, mode='linear', align_corners=False).
# Each grid step gets its tile's schedule s = rel0 + lam (host-precomputed), builds
# the 2-tap interpolation mask with the tent formula max(0, 1 - |row - s|)
# (weights 1-lam / lam / 0, bit-identical to the explicit one-hot build), and does
# one small (B, W) x (W, T) matmul.  The (n_tiles, B, W) window tensor is fetched
# once (constant block index) and indexed by program_id.
# ----------------------------------------------------------------------------
def _upsample_kernel(xw_ref, s_ref, o_ref, *, window):
    xw = xw_ref[pl.program_id(0)]                      # (B, W)
    s = s_ref[...]                                     # (1, T) f32
    n = s.shape[-1]
    row = jax.lax.broadcasted_iota(jnp.int32, (window, n), 0).astype(jnp.float32)
    m = jnp.maximum(1.0 - jnp.abs(row - s), 0.0)       # (W, T) tent mask
    # TODO(synk): if the bundle shows the MXU push slot (weight reloads amortized
    # over only B=2 LHS rows) near the VALU cost -- worst on v5e -- restructure to a
    # block-structured (B*W, W*8) LHS with a (W*8, T/8) mask for sublane-dense
    # results/stores and 8x fewer MXU weight reloads (costs a post-kernel copy).
    o_ref[...] = jnp.dot(xw, m, preferred_element_type=jnp.float32)


# ----------------------------------------------------------------------------
# Glue: parameter setup (dense block-banded convT matrices, flat bias/BN vectors,
# host-precomputed interpolation schedule).
# ----------------------------------------------------------------------------
def _build_convT_matrix(w, l_in):
    # w: (Cin, Cout, K) PyTorch ConvTranspose1d weight; stride=2, padding=1, Lout=2*Lin.
    # TODO(synk): O(L^2) dense banded matrix; switch to a tiled banded formulation if
    # input length ever grows enough to pressure VMEM (esp. v7x's 64 MiB).
    w = np.asarray(w, np.float32)
    cin, cout, k = w.shape
    l_out = 2 * l_in
    m = np.zeros((l_in * cin, l_out * cout), np.float32)
    for l in range(l_in):
        for kk in range(k):
            t = 2 * l + kk - 1
            if 0 <= t < l_out:
                m[l * cin:(l + 1) * cin, t * cout:(t + 1) * cout] += w[:, :, kk]
    return jnp.asarray(m)


def _channel_select(l, c):
    # (l*c, c) one-hot of channel index for channel-minor flattening.
    return jnp.asarray(np.tile(np.eye(c, dtype=np.float32), (l, 1)))


def wav_decoder_forward(x, params, *, upsample_size=661500, tile=57344, window=8):
    b, cin, l0 = x.shape
    assert cin == 32 and tile % 128 == 0
    l1, l2, l3 = 2 * l0, 4 * l0, 8 * l0
    c1, c2 = 16, 8
    assert l3 >= window

    # glue: NCW -> (B, L*C) channel-minor flat
    x_flat = jnp.transpose(x, (0, 2, 1)).reshape(b, l0 * cin).astype(jnp.float32)

    w1f = _build_convT_matrix(params['w1'], l0)
    w2f = _build_convT_matrix(params['w2'], l1)
    w3f = _build_convT_matrix(params['w3'], l2)
    b1f = jnp.tile(params['b1'], l1)[None, :]
    b2f = jnp.tile(params['b2'], l2)[None, :]
    b3f = jnp.tile(params['b3'], l3)[None, :]
    g1f = jnp.tile(params['g1'], l1)[None, :]
    g2f = jnp.tile(params['g2'], l2)[None, :]
    be1f = jnp.tile(params['beta1'], l1)[None, :]
    be2f = jnp.tile(params['beta2'], l2)[None, :]
    s1 = _channel_select(l1, c1)
    s2 = _channel_select(l2, c2)

    # ---- host-precomputed (trace-time constant) interpolation schedule --------
    n_tiles = -(-upsample_size // tile)
    lp = n_tiles * tile
    scale = float(l3) / float(upsample_size)
    t = np.arange(lp, dtype=np.float64)
    src = np.maximum((t + 0.5) * scale - 0.5, 0.0)              # align_corners=False
    idx0 = np.minimum(np.floor(src).astype(np.int64), l3 - 1)
    # Fold the right-tap clamp (idx1 = min(idx0+1, L-1)) into lam: lam=0 there.
    lam = np.where(idx0 >= l3 - 1, 0.0, src - np.floor(src))
    bases = np.minimum(idx0.reshape(n_tiles, tile)[:, 0], l3 - window).astype(np.int64)
    rel0 = idx0 - np.repeat(bases, tile)
    assert rel0.min() >= 0 and rel0.max() < window
    assert np.all((rel0 + 1 < window) | (lam == 0.0))
    # Single streamed schedule: tent(row - s) gives weights {1-lam, lam, 0}.
    s_sched = (rel0.astype(np.float64) + lam).astype(np.float32)
    s_arr = jnp.asarray(s_sched.reshape(1, lp))

    # ---- trunk (runs once, everything VMEM-resident) ---------------------------
    trunk_inputs = (x_flat,
                    w1f, b1f, g1f, be1f, s1, s1.T,
                    w2f, b2f, g2f, be2f, s2, s2.T,
                    w3f, b3f)
    vmem = pl.BlockSpec(memory_space=pltpu.MemorySpace.VMEM)
    xwin = pl.pallas_call(
        functools.partial(_trunk_kernel, n1=float(b * l1), n2=float(b * l2),
                          bases=tuple(int(v) for v in bases), window=window),
        out_shape=jax.ShapeDtypeStruct((n_tiles, b, window), jnp.float32),
        in_specs=[vmem] * len(trunk_inputs),
        out_specs=vmem,
    )(*trunk_inputs)                                   # (n_tiles, B, W) windows

    # ---- upsample (exact-size output, parallel tiles for v7x's 2 TCs) ----------
    out = pl.pallas_call(
        functools.partial(_upsample_kernel, window=window),
        out_shape=jax.ShapeDtypeStruct((b, upsample_size), jnp.float32),
        grid=(n_tiles,),
        in_specs=[pl.BlockSpec((n_tiles, b, window), lambda i: (0, 0, 0)),  # resident
                  pl.BlockSpec((1, tile), lambda i: (0, i))],
        out_specs=pl.BlockSpec((b, tile), lambda i: (0, i)),
        compiler_params=pltpu.CompilerParams(dimension_semantics=("parallel",)),
    )(xwin, s_arr)

    return out.reshape(b, 1, upsample_size)            # NCW like PyTorch (free reshape)


# ----------------------------------------------------------------------------
# Pure numpy (fp64) reference of the PyTorch forward (training-mode BN).
# ----------------------------------------------------------------------------
def _ref_forward(x, params, upsample_size):
    x = np.asarray(x, np.float64)

    def convT(h, w, bias):
        w = np.asarray(w, np.float64)
        bias = np.asarray(bias, np.float64)
        bsz, _, l = h.shape
        _, cout, k = w.shape
        lo = 2 * l
        y = np.zeros((bsz, cout, lo), np.float64)
        for li in range(l):
            for kk in range(k):
                t = 2 * li + kk - 1
                if 0 <= t < lo:
                    y[:, :, t] += np.einsum('bi,io->bo', h[:, :, li], w[:, :, kk])
        return y + bias[None, :, None]

    def bn_relu(h, g, beta):
        g = np.asarray(g, np.float64)
        beta = np.asarray(beta, np.float64)
        mean = h.mean(axis=(0, 2), keepdims=True)
        var = h.var(axis=(0, 2), keepdims=True)               # biased
        hn = (h - mean) / np.sqrt(var + EPS) * g[None, :, None] + beta[None, :, None]
        return np.maximum(hn, 0.0)

    h = bn_relu(convT(x, params['w1'], params['b1']), params['g1'], params['beta1'])
    h = bn_relu(convT(h, params['w2'], params['b2']), params['g2'], params['beta2'])
    h = convT(h, params['w3'], params['b3'])                   # (B, 1, L3)
    sig = h[:, 0, :]
    l3 = sig.shape[-1]
    scale = l3 / float(upsample_size)
    t = np.arange(upsample_size, dtype=np.float64)
    src = np.maximum((t + 0.5) * scale - 0.5, 0.0)
    i0 = np.minimum(np.floor(src).astype(np.int64), l3 - 1)
    i1 = np.minimum(i0 + 1, l3 - 1)
    lam = src - np.floor(src)
    out = (1.0 - lam)[None, :] * sig[:, i0] + lam[None, :] * sig[:, i1]
    return out[:, None, :]


if __name__ == "__main__":
    key = jax.random.PRNGKey(0)
    ks = jax.random.split(key, 11)
    # Deterministic synthetic parameters (shapes follow WavDecoder.__init__).
    params = {
        'w1': 0.10 * jax.random.normal(ks[0], (32, 16, 4), jnp.float32),
        'b1': 0.05 * jax.random.normal(ks[1], (16,), jnp.float32),
        'g1': 1.0 + 0.10 * jax.random.normal(ks[2], (16,), jnp.float32),
        'beta1': 0.05 * jax.random.normal(ks[3], (16,), jnp.float32),
        'w2': 0.10 * jax.random.normal(ks[4], (16, 8, 4), jnp.float32),
        'b2': 0.05 * jax.random.normal(ks[5], (8,), jnp.float32),
        'g2': 1.0 + 0.10 * jax.random.normal(ks[6], (8,), jnp.float32),
        'beta2': 0.05 * jax.random.normal(ks[7], (8,), jnp.float32),
        'w3': 0.10 * jax.random.normal(ks[8], (8, 1, 4), jnp.float32),
        'b3': 0.05 * jax.random.normal(ks[9], (1,), jnp.float32),
    }
    # Small input consistent with the module: (batch=2, channels=32, length=8), NCW.
    x = jax.random.normal(ks[10], (2, 32, 8), jnp.float32)

    y = wav_decoder_forward(x, params)
    jax.block_until_ready(y)
    assert y.shape == (2, 1, 661500) and y.dtype == jnp.float32

    # Boundary / correctness check against the fp64 numpy reference (covers the
    # t=661499 right-tap clamp and verifies the padded upsample tail is masked).
    y_np = np.asarray(y)
    assert np.all(np.isfinite(y_np))
    ref = _ref_forward(np.asarray(x), params, 661500)
    np.testing.assert_allclose(y_np, ref, rtol=5e-2, atol=5e-2)

    print("KERNEL_OK")
</pallas_src>

<mosaic_0001>
module attributes {stable_mosaic.version = 11 : i64} {
  func.func @_trunk_kernel(%arg0: memref<2x256xf32, #tpu.memory_space<vmem>>, %arg1: memref<256x256xf32, #tpu.memory_space<vmem>>, %arg2: memref<1x256xf32, #tpu.memory_space<vmem>>, %arg3: memref<1x256xf32, #tpu.memory_space<vmem>>, %arg4: memref<1x256xf32, #tpu.memory_space<vmem>>, %arg5: memref<256x16xf32, #tpu.memory_space<vmem>>, %arg6: memref<16x256xf32, #tpu.memory_space<vmem>>, %arg7: memref<256x256xf32, #tpu.memory_space<vmem>>, %arg8: memref<1x256xf32, #tpu.memory_space<vmem>>, %arg9: memref<1x256xf32, #tpu.memory_space<vmem>>, %arg10: memref<1x256xf32, #tpu.memory_space<vmem>>, %arg11: memref<256x8xf32, #tpu.memory_space<vmem>>, %arg12: memref<8x256xf32, #tpu.memory_space<vmem>>, %arg13: memref<256x64xf32, #tpu.memory_space<vmem>>, %arg14: memref<1x64xf32, #tpu.memory_space<vmem>>, %arg15: memref<12x2x8xf32, #tpu.memory_space<vmem>>) attributes {dimension_semantics = [], scalar_prefetch = 0 : i64, scratch_operands = 0 : i64, tpu.core_type = #tpu.core_type<tc>} {
    %c0 = arith.constant 0 : index
    %c0_0 = arith.constant 0 : index
    %0 = vector.load %arg0[%c0, %c0_0] : memref<2x256xf32, #tpu.memory_space<vmem>>, vector<2x256xf32>
    %c0_1 = arith.constant 0 : index
    %c0_2 = arith.constant 0 : index
    %1 = vector.load %arg1[%c0_1, %c0_2] : memref<256x256xf32, #tpu.memory_space<vmem>>, vector<256x256xf32>
    %cst = arith.constant dense<0.000000e+00> : vector<2x256xf32>
    %2 = tpu.matmul %0, %1, %cst {dimension_numbers = #tpu.dot_dimension_numbers<[1], [0], [0], [1], [0, 0, 1, 1], [], []>} : vector<2x256xf32>, vector<256x256xf32>, vector<2x256xf32> -> vector<2x256xf32>
    %c0_3 = arith.constant 0 : index
    %c0_4 = arith.constant 0 : index
    %3 = vector.load %arg2[%c0_3, %c0_4] : memref<1x256xf32, #tpu.memory_space<vmem>>, vector<1x256xf32>
    %4 = vector.broadcast %3 : vector<1x256xf32> to vector<2x256xf32>
    %5 = arith.addf %2, %4 : vector<2x256xf32>
    %c0_5 = arith.constant 0 : index
    %c0_6 = arith.constant 0 : index
    %6 = vector.load %arg5[%c0_5, %c0_6] : memref<256x16xf32, #tpu.memory_space<vmem>>, vector<256x16xf32>
    %cst_7 = arith.constant dense<0.000000e+00> : vector<2x16xf32>
    %7 = tpu.matmul %5, %6, %cst_7 {dimension_numbers = #tpu.dot_dimension_numbers<[1], [0], [0], [1], [0, 0, 1, 1], [], []>} : vector<2x256xf32>, vector<256x16xf32>, vector<2x16xf32> -> vector<2x16xf32>
    %cst_8 = arith.constant dense<0.000000e+00> : vector<16xf32>
    %8 = vector.multi_reduction <add>, %7, %cst_8 [0] : vector<2x16xf32> to vector<16xf32>
    %9 = vector.shape_cast %8 : vector<16xf32> to vector<1x16xf32>
    %cst_9 = arith.constant 3.200000e+01 : f32
    %10 = vector.broadcast %cst_9 : f32 to vector<1x16xf32>
    %11 = arith.divf %9, %10 : vector<1x16xf32>
    %c0_10 = arith.constant 0 : index
    %c0_11 = arith.constant 0 : index
    %12 = vector.load %arg6[%c0_10, %c0_11] : memref<16x256xf32, #tpu.memory_space<vmem>>, vector<16x256xf32>
    %cst_12 = arith.constant dense<0.000000e+00> : vector<1x256xf32>
    %13 = tpu.matmul %11, %12, %cst_12 {dimension_numbers = #tpu.dot_dimension_numbers<[1], [0], [0], [1], [0, 0, 1, 1], [], []>} : vector<1x16xf32>, vector<16x256xf32>, vector<1x256xf32> -> vector<1x256xf32>
    %14 = vector.broadcast %13 : vector<1x256xf32> to vector<2x256xf32>
    %15 = arith.subf %5, %14 : vector<2x256xf32>
    %16 = arith.mulf %15, %15 : vector<2x256xf32>
    %c0_13 = arith.constant 0 : index
    %c0_14 = arith.constant 0 : index
    %17 = vector.load %arg5[%c0_13, %c0_14] : memref<256x16xf32, #tpu.memory_space<vmem>>, vector<256x16xf32>
    %cst_15 = arith.constant dense<0.000000e+00> : vector<2x16xf32>
    %18 = tpu.matmul %16, %17, %cst_15 {dimension_numbers = #tpu.dot_dimension_numbers<[1], [0], [0], [1], [0, 0, 1, 1], [], []>} : vector<2x256xf32>, vector<256x16xf32>, vector<2x16xf32> -> vector<2x16xf32>
    %cst_16 = arith.constant dense<0.000000e+00> : vector<16xf32>
    %19 = vector.multi_reduction <add>, %18, %cst_16 [0] : vector<2x16xf32> to vector<16xf32>
    %20 = vector.shape_cast %19 : vector<16xf32> to vector<1x16xf32>
    %cst_17 = arith.constant 3.200000e+01 : f32
    %21 = vector.broadcast %cst_17 : f32 to vector<1x16xf32>
    %22 = arith.divf %20, %21 : vector<1x16xf32>
    %cst_18 = arith.constant 9.99999974E-6 : f32
    %23 = vector.broadcast %cst_18 : f32 to vector<1x16xf32>
    %24 = arith.addf %22, %23 : vector<1x16xf32>
    %25 = math.rsqrt %24 : vector<1x16xf32>
    %c0_19 = arith.constant 0 : index
    %c0_20 = arith.constant 0 : index
    %26 = vector.load %arg6[%c0_19, %c0_20] : memref<16x256xf32, #tpu.memory_space<vmem>>, vector<16x256xf32>
    %cst_21 = arith.constant dense<0.000000e+00> : vector<1x256xf32>
    %27 = tpu.matmul %25, %26, %cst_21 {dimension_numbers = #tpu.dot_dimension_numbers<[1], [0], [0], [1], [0, 0, 1, 1], [], []>} : vector<1x16xf32>, vector<16x256xf32>, vector<1x256xf32> -> vector<1x256xf32>
    %28 = vector.broadcast %27 : vector<1x256xf32> to vector<2x256xf32>
    %29 = arith.mulf %15, %28 : vector<2x256xf32>
    %c0_22 = arith.constant 0 : index
    %c0_23 = arith.constant 0 : index
    %30 = vector.load %arg3[%c0_22, %c0_23] : memref<1x256xf32, #tpu.memory_space<vmem>>, vector<1x256xf32>
    %31 = vector.broadcast %30 : vector<1x256xf32> to vector<2x256xf32>
    %32 = arith.mulf %29, %31 : vector<2x256xf32>
    %c0_24 = arith.constant 0 : index
    %c0_25 = arith.constant 0 : index
    %33 = vector.load %arg4[%c0_24, %c0_25] : memref<1x256xf32, #tpu.memory_space<vmem>>, vector<1x256xf32>
    %34 = vector.broadcast %33 : vector<1x256xf32> to vector<2x256xf32>
    %35 = arith.addf %32, %34 : vector<2x256xf32>
    %cst_26 = arith.constant 0.000000e+00 : f32
    %36 = vector.broadcast %cst_26 : f32 to vector<2x256xf32>
    %37 = arith.maximumf %35, %36 : vector<2x256xf32>
    %c0_27 = arith.constant 0 : index
    %c0_28 = arith.constant 0 : index
    %38 = vector.load %arg7[%c0_27, %c0_28] : memref<256x256xf32, #tpu.memory_space<vmem>>, vector<256x256xf32>
    %cst_29 = arith.constant dense<0.000000e+00> : vector<2x256xf32>
    %39 = tpu.matmul %37, %38, %cst_29 {dimension_numbers = #tpu.dot_dimension_numbers<[1], [0], [0], [1], [0, 0, 1, 1], [], []>} : vector<2x256xf32>, vector<256x256xf32>, vector<2x256xf32> -> vector<2x256xf32>
    %c0_30 = arith.constant 0 : index
    %c0_31 = arith.constant 0 : index
    %40 = vector.load %arg8[%c0_30, %c0_31] : memref<1x256xf32, #tpu.memory_space<vmem>>, vector<1x256xf32>
    %41 = vector.broadcast %40 : vector<1x256xf32> to vector<2x256xf32>
    %42 = arith.addf %39, %41 : vector<2x256xf32>
    %c0_32 = arith.constant 0 : index
    %c0_33 = arith.constant 0 : index
    %43 = vector.load %arg11[%c0_32, %c0_33] : memref<256x8xf32, #tpu.memory_space<vmem>>, vector<256x8xf32>
    %cst_34 = arith.constant dense<0.000000e+00> : vector<2x8xf32>
    %44 = tpu.matmul %42, %43, %cst_34 {dimension_numbers = #tpu.dot_dimension_numbers<[1], [0], [0], [1], [0, 0, 1, 1], [], []>} : vector<2x256xf32>, vector<256x8xf32>, vector<2x8xf32> -> vector<2x8xf32>
    %cst_35 = arith.constant dense<0.000000e+00> : vector<8xf32>
    %45 = vector.multi_reduction <add>, %44, %cst_35 [0] : vector<2x8xf32> to vector<8xf32>
    %46 = vector.shape_cast %45 : vector<8xf32> to vector<1x8xf32>
    %cst_36 = arith.constant 6.400000e+01 : f32
    %47 = vector.broadcast %cst_36 : f32 to vector<1x8xf32>
    %48 = arith.divf %46, %47 : vector<1x8xf32>
    %c0_37 = arith.constant 0 : index
    %c0_38 = arith.constant 0 : index
    %49 = vector.load %arg12[%c0_37, %c0_38] : memref<8x256xf32, #tpu.memory_space<vmem>>, vector<8x256xf32>
    %cst_39 = arith.constant dense<0.000000e+00> : vector<1x256xf32>
    %50 = tpu.matmul %48, %49, %cst_39 {dimension_numbers = #tpu.dot_dimension_numbers<[1], [0], [0], [1], [0, 0, 1, 1], [], []>} : vector<1x8xf32>, vector<8x256xf32>, vector<1x256xf32> -> vector<1x256xf32>
    %51 = vector.broadcast %50 : vector<1x256xf32> to vector<2x256xf32>
    %52 = arith.subf %42, %51 : vector<2x256xf32>
    %53 = arith.mulf %52, %52 : vector<2x256xf32>
    %c0_40 = arith.constant 0 : index
    %c0_41 = arith.constant 0 : index
    %54 = vector.load %arg11[%c0_40, %c0_41] : memref<256x8xf32, #tpu.memory_space<vmem>>, vector<256x8xf32>
    %cst_42 = arith.constant dense<0.000000e+00> : vector<2x8xf32>
    %55 = tpu.matmul %53, %54, %cst_42 {dimension_numbers = #tpu.dot_dimension_numbers<[1], [0], [0], [1], [0, 0, 1, 1], [], []>} : vector<2x256xf32>, vector<256x8xf32>, vector<2x8xf32> -> vector<2x8xf32>
    %cst_43 = arith.constant dense<0.000000e+00> : vector<8xf32>
    %56 = vector.multi_reduction <add>, %55, %cst_43 [0] : vector<2x8xf32> to vector<8xf32>
    %57 = vector.shape_cast %56 : vector<8xf32> to vector<1x8xf32>
    %cst_44 = arith.constant 6.400000e+01 : f32
    %58 = vector.broadcast %cst_44 : f32 to vector<1x8xf32>
    %59 = arith.divf %57, %58 : vector<1x8xf32>
    %cst_45 = arith.constant 9.99999974E-6 : f32
    %60 = vector.broadcast %cst_45 : f32 to vector<1x8xf32>
    %61 = arith.addf %59, %60 : vector<1x8xf32>
    %62 = math.rsqrt %61 : vector<1x8xf32>
    %c0_46 = arith.constant 0 : index
    %c0_47 = arith.constant 0 : index
    %63 = vector.load %arg12[%c0_46, %c0_47] : memref<8x256xf32, #tpu.memory_space<vmem>>, vector<8x256xf32>
    %cst_48 = arith.constant dense<0.000000e+00> : vector<1x256xf32>
    %64 = tpu.matmul %62, %63, %cst_48 {dimension_numbers = #tpu.dot_dimension_numbers<[1], [0], [0], [1], [0, 0, 1, 1], [], []>} : vector<1x8xf32>, vector<8x256xf32>, vector<1x256xf32> -> vector<1x256xf32>
    %65 = vector.broadcast %64 : vector<1x256xf32> to vector<2x256xf32>
    %66 = arith.mulf %52, %65 : vector<2x256xf32>
    %c0_49 = arith.constant 0 : index
    %c0_50 = arith.constant 0 : index
    %67 = vector.load %arg9[%c0_49, %c0_50] : memref<1x256xf32, #tpu.memory_space<vmem>>, vector<1x256xf32>
    %68 = vector.broadcast %67 : vector<1x256xf32> to vector<2x256xf32>
    %69 = arith.mulf %66, %68 : vector<2x256xf32>
    %c0_51 = arith.constant 0 : index
    %c0_52 = arith.constant 0 : index
    %70 = vector.load %arg10[%c0_51, %c0_52] : memref<1x256xf32, #tpu.memory_space<vmem>>, vector<1x256xf32>
    %71 = vector.broadcast %70 : vector<1x256xf32> to vector<2x256xf32>
    %72 = arith.addf %69, %71 : vector<2x256xf32>
    %cst_53 = arith.constant 0.000000e+00 : f32
    %73 = vector.broadcast %cst_53 : f32 to vector<2x256xf32>
    %74 = arith.maximumf %72, %73 : vector<2x256xf32>
    %c0_54 = arith.constant 0 : index
    %c0_55 = arith.constant 0 : index
    %75 = vector.load %arg13[%c0_54, %c0_55] : memref<256x64xf32, #tpu.memory_space<vmem>>, vector<256x64xf32>
    %cst_56 = arith.constant dense<0.000000e+00> : vector<2x64xf32>
    %76 = tpu.matmul %74, %75, %cst_56 {dimension_numbers = #tpu.dot_dimension_numbers<[1], [0], [0], [1], [0, 0, 1, 1], [], []>} : vector<2x256xf32>, vector<256x64xf32>, vector<2x64xf32> -> vector<2x64xf32>
    %c0_57 = arith.constant 0 : index
    %c0_58 = arith.constant 0 : index
    %77 = vector.load %arg14[%c0_57, %c0_58] : memref<1x64xf32, #tpu.memory_space<vmem>>, vector<1x64xf32>
    %78 = vector.broadcast %77 : vector<1x64xf32> to vector<2x64xf32>
    %79 = arith.addf %76, %78 : vector<2x64xf32>
    %80 = vector.extract_strided_slice %79 {offsets = [0, 0], sizes = [2, 8], strides = [1, 1]} : vector<2x64xf32> to vector<2x8xf32>
    %c0_59 = arith.constant 0 : index
    %c0_60 = arith.constant 0 : index
    %c0_61 = arith.constant 0 : index
    %81 = vector.load %arg15[%c0_59, %c0_60, %c0_61] : memref<12x2x8xf32, #tpu.memory_space<vmem>>, vector<1x2x8xf32>
    %82 = vector.shape_cast %81 : vector<1x2x8xf32> to vector<2x8xf32>
    %83 = vector.shape_cast %80 : vector<2x8xf32> to vector<1x2x8xf32>
    tpu.vector_store %arg15[%c0_59, %c0_60, %c0_61], %83 {strides = array<i32>} : memref<12x2x8xf32, #tpu.memory_space<vmem>>, vector<1x2x8xf32>,
    %84 = vector.extract_strided_slice %79 {offsets = [0, 5], sizes = [2, 8], strides = [1, 1]} : vector<2x64xf32> to vector<2x8xf32>
    %c1 = arith.constant 1 : index
    %c0_62 = arith.constant 0 : index
    %c0_63 = arith.constant 0 : index
    %85 = vector.load %arg15[%c1, %c0_62, %c0_63] : memref<12x2x8xf32, #tpu.memory_space<vmem>>, vector<1x2x8xf32>
    %86 = vector.shape_cast %85 : vector<1x2x8xf32> to vector<2x8xf32>
    %87 = vector.shape_cast %84 : vector<2x8xf32> to vector<1x2x8xf32>
    tpu.vector_store %arg15[%c1, %c0_62, %c0_63], %87 {strides = array<i32>} : memref<12x2x8xf32, #tpu.memory_space<vmem>>, vector<1x2x8xf32>,
    %88 = vector.extract_strided_slice %79 {offsets = [0, 10], sizes = [2, 8], strides = [1, 1]} : vector<2x64xf32> to vector<2x8xf32>
    %c2 = arith.constant 2 : index
    %c0_64 = arith.constant 0 : index
    %c0_65 = arith.constant 0 : index
    %89 = vector.load %arg15[%c2, %c0_64, %c0_65] : memref<12x2x8xf32, #tpu.memory_space<vmem>>, vector<1x2x8xf32>
    %90 = vector.shape_cast %89 : vector<1x2x8xf32> to vector<2x8xf32>
    %91 = vector.shape_cast %88 : vector<2x8xf32> to vector<1x2x8xf32>
    tpu.vector_store %arg15[%c2, %c0_64, %c0_65], %91 {strides = array<i32>} : memref<12x2x8xf32, #tpu.memory_space<vmem>>, vector<1x2x8xf32>,
    %92 = vector.extract_strided_slice %79 {offsets = [0, 16], sizes = [2, 8], strides = [1, 1]} : vector<2x64xf32> to vector<2x8xf32>
    %c3 = arith.constant 3 : index
    %c0_66 = arith.constant 0 : index
    %c0_67 = arith.constant 0 : index
    %93 = vector.load %arg15[%c3, %c0_66, %c0_67] : memref<12x2x8xf32, #tpu.memory_space<vmem>>, vector<1x2x8xf32>
    %94 = vector.shape_cast %93 : vector<1x2x8xf32> to vector<2x8xf32>
    %95 = vector.shape_cast %92 : vector<2x8xf32> to vector<1x2x8xf32>
    tpu.vector_store %arg15[%c3, %c0_66, %c0_67], %95 {strides = array<i32>} : memref<12x2x8xf32, #tpu.memory_space<vmem>>, vector<1x2x8xf32>,
    %96 = vector.extract_strided_slice %79 {offsets = [0, 21], sizes = [2, 8], strides = [1, 1]} : vector<2x64xf32> to vector<2x8xf32>
    %c4 = arith.constant 4 : index
    %c0_68 = arith.constant 0 : index
    %c0_69 = arith.constant 0 : index
    %97 = vector.load %arg15[%c4, %c0_68, %c0_69] : memref<12x2x8xf32, #tpu.memory_space<vmem>>, vector<1x2x8xf32>
    %98 = vector.shape_cast %97 : vector<1x2x8xf32> to vector<2x8xf32>
    %99 = vector.shape_cast %96 : vector<2x8xf32> to vector<1x2x8xf32>
    tpu.vector_store %arg15[%c4, %c0_68, %c0_69], %99 {strides = array<i32>} : memref<12x2x8xf32, #tpu.memory_space<vmem>>, vector<1x2x8xf32>,
    %100 = vector.extract_strided_slice %79 {offsets = [0, 27], sizes = [2, 8], strides = [1, 1]} : vector<2x64xf32> to vector<2x8xf32>
    %c5 = arith.constant 5 : index
    %c0_70 = arith.constant 0 : index
    %c0_71 = arith.constant 0 : index
    %101 = vector.load %arg15[%c5, %c0_70, %c0_71] : memref<12x2x8xf32, #tpu.memory_space<vmem>>, vector<1x2x8xf32>
    %102 = vector.shape_cast %101 : vector<1x2x8xf32> to vector<2x8xf32>
    %103 = vector.shape_cast %100 : vector<2x8xf32> to vector<1x2x8xf32>
    tpu.vector_store %arg15[%c5, %c0_70, %c0_71], %103 {strides = array<i32>} : memref<12x2x8xf32, #tpu.memory_space<vmem>>, vector<1x2x8xf32>,
    %104 = vector.extract_strided_slice %79 {offsets = [0, 32], sizes = [2, 8], strides = [1, 1]} : vector<2x64xf32> to vector<2x8xf32>
    %c6 = arith.constant 6 : index
    %c0_72 = arith.constant 0 : index
    %c0_73 = arith.constant 0 : index
    %105 = vector.load %arg15[%c6, %c0_72, %c0_73] : memref<12x2x8xf32, #tpu.memory_space<vmem>>, vector<1x2x8xf32>
    %106 = vector.shape_cast %105 : vector<1x2x8xf32> to vector<2x8xf32>
    %107 = vector.shape_cast %104 : vector<2x8xf32> to vector<1x2x8xf32>
    tpu.vector_store %arg15[%c6, %c0_72, %c0_73], %107 {strides = array<i32>} : memref<12x2x8xf32, #tpu.memory_space<vmem>>, vector<1x2x8xf32>,
    %108 = vector.extract_strided_slice %79 {offsets = [0, 38], sizes = [2, 8], strides = [1, 1]} : vector<2x64xf32> to vector<2x8xf32>
    %c7 = arith.constant 7 : index
    %c0_74 = arith.constant 0 : index
    %c0_75 = arith.constant 0 : index
    %109 = vector.load %arg15[%c7, %c0_74, %c0_75] : memref<12x2x8xf32, #tpu.memory_space<vmem>>, vector<1x2x8xf32>
    %110 = vector.shape_cast %109 : vector<1x2x8xf32> to vector<2x8xf32>
    %111 = vector.shape_cast %108 : vector<2x8xf32> to vector<1x2x8xf32>
    tpu.vector_store %arg15[%c7, %c0_74, %c0_75], %111 {strides = array<i32>} : memref<12x2x8xf32, #tpu.memory_space<vmem>>, vector<1x2x8xf32>,
    %112 = vector.extract_strided_slice %79 {offsets = [0, 43], sizes = [2, 8], strides = [1, 1]} : vector<2x64xf32> to vector<2x8xf32>
    %c8 = arith.constant 8 : index
    %c0_76 = arith.constant 0 : index
    %c0_77 = arith.constant 0 : index
    %113 = vector.load %arg15[%c8, %c0_76, %c0_77] : memref<12x2x8xf32, #tpu.memory_space<vmem>>, vector<1x2x8xf32>
    %114 = vector.shape_cast %113 : vector<1x2x8xf32> to vector<2x8xf32>
    %115 = vector.shape_cast %112 : vector<2x8xf32> to vector<1x2x8xf32>
    tpu.vector_store %arg15[%c8, %c0_76, %c0_77], %115 {strides = array<i32>} : memref<12x2x8xf32, #tpu.memory_space<vmem>>, vector<1x2x8xf32>,
    %116 = vector.extract_strided_slice %79 {offsets = [0, 49], sizes = [2, 8], strides = [1, 1]} : vector<2x64xf32> to vector<2x8xf32>
    %c9 = arith.constant 9 : index
    %c0_78 = arith.constant 0 : index
    %c0_79 = arith.constant 0 : index
    %117 = vector.load %arg15[%c9, %c0_78, %c0_79] : memref<12x2x8xf32, #tpu.memory_space<vmem>>, vector<1x2x8xf32>
    %118 = vector.shape_cast %117 : vector<1x2x8xf32> to vector<2x8xf32>
    %119 = vector.shape_cast %116 : vector<2x8xf32> to vector<1x2x8xf32>
    tpu.vector_store %arg15[%c9, %c0_78, %c0_79], %119 {strides = array<i32>} : memref<12x2x8xf32, #tpu.memory_space<vmem>>, vector<1x2x8xf32>,
    %120 = vector.extract_strided_slice %79 {offsets = [0, 54], sizes = [2, 8], strides = [1, 1]} : vector<2x64xf32> to vector<2x8xf32>
    %c10 = arith.constant 10 : index
    %c0_80 = arith.constant 0 : index
    %c0_81 = arith.constant 0 : index
    %121 = vector.load %arg15[%c10, %c0_80, %c0_81] : memref<12x2x8xf32, #tpu.memory_space<vmem>>, vector<1x2x8xf32>
    %122 = vector.shape_cast %121 : vector<1x2x8xf32> to vector<2x8xf32>
    %123 = vector.shape_cast %120 : vector<2x8xf32> to vector<1x2x8xf32>
    tpu.vector_store %arg15[%c10, %c0_80, %c0_81], %123 {strides = array<i32>} : memref<12x2x8xf32, #tpu.memory_space<vmem>>, vector<1x2x8xf32>,
    %124 = vector.extract_strided_slice %79 {offsets = [0, 56], sizes = [2, 8], strides = [1, 1]} : vector<2x64xf32> to vector<2x8xf32>
    %c11 = arith.constant 11 : index
    %c0_82 = arith.constant 0 : index
    %c0_83 = arith.constant 0 : index
    %125 = vector.load %arg15[%c11, %c0_82, %c0_83] : memref<12x2x8xf32, #tpu.memory_space<vmem>>, vector<1x2x8xf32>
    %126 = vector.shape_cast %125 : vector<1x2x8xf32> to vector<2x8xf32>
    %127 = vector.shape_cast %124 : vector<2x8xf32> to vector<1x2x8xf32>
    tpu.vector_store %arg15[%c11, %c0_82, %c0_83], %127 {strides = array<i32>} : memref<12x2x8xf32, #tpu.memory_space<vmem>>, vector<1x2x8xf32>,
    return
  }
}

</mosaic_0001>

<llo_original>
// kernel: tpu_custom_call.1
$region0: #{tpu_custom_call.1}
  #allocation0 [shape = 'u32[]', space=smem, size = 0x4, offset = 0x4, fixed_abs, tag = 'smem constant byte address 0x4 - core index']
  #allocation1 [shape = 'u32[144,128]{1,0:T(1,128)}', space=vmem, size = 0x12000, scoped, tag = 'internal scratch']
  %s0 = inlined_call_operand.vmem [shape: f32[2,256], index: 0, kind: input, shape index: {}]
  %s1 = inlined_call_operand.vmem [shape: f32[256,256], index: 1, kind: input, shape index: {}]
  %s2 = inlined_call_operand.vmem [shape: f32[1,256], index: 2, kind: input, shape index: {}]
  %s3 = inlined_call_operand.vmem [shape: f32[1,256], index: 3, kind: input, shape index: {}]
  %s4 = inlined_call_operand.vmem [shape: f32[1,256], index: 4, kind: input, shape index: {}]
  %s5 = inlined_call_operand.vmem [shape: f32[256,16], index: 5, kind: input, shape index: {}]
  %s6 = inlined_call_operand.vmem [shape: f32[16,256], index: 6, kind: input, shape index: {}]
  %s7 = inlined_call_operand.hbm [shape: f32[256,256], index: 7, kind: input, shape index: {}]
  %s8 = inlined_call_operand.vmem [shape: f32[1,256], index: 8, kind: input, shape index: {}]
  %s9 = inlined_call_operand.vmem [shape: f32[1,256], index: 9, kind: input, shape index: {}]
  %s10 = inlined_call_operand.vmem [shape: f32[1,256], index: 10, kind: input, shape index: {}]
  %s11 = inlined_call_operand.vmem [shape: f32[256,8], index: 11, kind: input, shape index: {}]
  %s12 = inlined_call_operand.vmem [shape: f32[8,256], index: 12, kind: input, shape index: {}]
  %s13 = inlined_call_operand.vmem [shape: f32[256,64], index: 13, kind: input, shape index: {}]
  %s14 = inlined_call_operand.vmem [shape: f32[1,64], index: 14, kind: input, shape index: {}]
  %s15 = inlined_call_operand.vmem [shape: f32[12,2,8], index: 15, kind: output, shape index: {}]
  %s16 = sld [smem:[#allocation0]]
  $region74: #{tpu_custom_call.1} parent=0
    _
  %s18 = ssub.s32 1, %s16
  %s19 = scalar_select 0, %s18, %s16
  $region1: #{tpu_custom_call.1} parent=0
    #allocation2 [shape = 'u8[262144]{0}', space=vmem, size = 0x40000, scoped, tag = 'input window, operand 7, single buffered']
    #allocation3 [shape = 's32[1]{0}', space=sflag, size = 0x4, scoped, tag = 'scoped memory for tpu_custom_call.1']
    %20 = vsyncpa [#allocation3], 0
    // Predicated region
    $region2: #{tpu_custom_call.1} parent=1 // pred_check
      _
    $region3: #{tpu_custom_call.1} parent=1 // pred_check_branch
      %22 = sbr.rel (0) target = $region5
    $region4: #{tpu_custom_call.1} parent=1 // pred_region
      _
    $region5: #{tpu_custom_call.1} parent=1 // pred_fallthru
      _
    // Predicated region
    $region6: #{tpu_custom_call.1} parent=1 // pred_check
      _
    $region7: #{tpu_custom_call.1} parent=1 // pred_check_branch
      %24 = sbr.rel (0) target = $region9
    $region8: #{tpu_custom_call.1} parent=1 // pred_region
      _
    $region9: #{tpu_custom_call.1} parent=1 // pred_fallthru
      _
    // Predicated region
    $region10: #{tpu_custom_call.1} parent=1 // pred_check
      _
    $region11: #{tpu_custom_call.1} parent=1 // pred_check_branch
      %26 = sbr.rel (0) target = $region13
    $region12: #{tpu_custom_call.1} parent=1 // pred_region
      _
    $region13: #{tpu_custom_call.1} parent=1 // pred_fallthru
      _
    // Predicated region
    $region14: #{tpu_custom_call.1} parent=1 // pred_check
      _
    $region15: #{tpu_custom_call.1} parent=1 // pred_check_branch
      %28 = sbr.rel (0) target = $region17
    $region16: #{tpu_custom_call.1} parent=1 // pred_region
      _
    $region17: #{tpu_custom_call.1} parent=1 // pred_fallthru
      _
    // Predicated region
    $region18: #{tpu_custom_call.1} parent=1 // pred_check
      _
    $region19: #{tpu_custom_call.1} parent=1 // pred_check_branch
      %30 = sbr.rel (0) target = $region21
    $region20: #{tpu_custom_call.1} parent=1 // pred_region
      _
    $region21: #{tpu_custom_call.1} parent=1 // pred_fallthru
      _
    // Predicated region
    $region22: #{tpu_custom_call.1} parent=1 // pred_check
      _
    $region23: #{tpu_custom_call.1} parent=1 // pred_check_branch
      %32 = sbr.rel (0) target = $region25
    $region24: #{tpu_custom_call.1} parent=1 // pred_region
      _
    $region25: #{tpu_custom_call.1} parent=1 // pred_fallthru
      _
    // Predicated region
    $region26: #{tpu_custom_call.1} parent=1 // pred_check
      _
    $region27: #{tpu_custom_call.1} parent=1 // pred_check_branch
      %34 = sbr.rel (0) target = $region29
    $region28: #{tpu_custom_call.1} parent=1 // pred_region
      _
    $region29: #{tpu_custom_call.1} parent=1 // pred_fallthru
      _
    // Predicated region
    $region30: #{tpu_custom_call.1} parent=1 // pred_check
      _
    $region31: #{tpu_custom_call.1} parent=1 // pred_check_branch
      %36 = sbr.rel (0) target = $region33
    $region32: #{tpu_custom_call.1} parent=1 // pred_region
      %s38 = ssub.s32 8192, 8192
      %39 = vsyncadd [#allocation3], %s38
      %s40 = sshll.u32 [#allocation2], 4
      %s41 = int_to_ptr.vmem [resolvable:$true] %s40
      %46 = dma.hbm_to_vmem [thread:$0]  %s7, 8192, %s41, [#allocation3], 256, 256, 16
    $region33: #{tpu_custom_call.1} parent=1 // pred_fallthru
      _
    // Predicated region
    $region34: #{tpu_custom_call.1} parent=1 // pred_check
      _
    $region35: #{tpu_custom_call.1} parent=1 // pred_check_branch
      %48 = sbr.rel (0) target = $region37
    $region36: #{tpu_custom_call.1} parent=1 // pred_region
      _
    $region37: #{tpu_custom_call.1} parent=1 // pred_fallthru
      _
    // Predicated region
    $region38: #{tpu_custom_call.1} parent=1 // pred_check
      _
    $region39: #{tpu_custom_call.1} parent=1 // pred_check_branch
      %50 = sbr.rel (0) target = $region41
    $region40: #{tpu_custom_call.1} parent=1 // pred_region
      _
    $region41: #{tpu_custom_call.1} parent=1 // pred_fallthru
      _
    // Predicated region
    $region42: #{tpu_custom_call.1} parent=1 // pred_check
      _
    $region43: #{tpu_custom_call.1} parent=1 // pred_check_branch
      %52 = sbr.rel (0) target = $region45
    $region44: #{tpu_custom_call.1} parent=1 // pred_region
      _
    $region45: #{tpu_custom_call.1} parent=1 // pred_fallthru
      _
    // Predicated region
    $region46: #{tpu_custom_call.1} parent=1 // pred_check
      _
    $region47: #{tpu_custom_call.1} parent=1 // pred_check_branch
      %54 = sbr.rel (0) target = $region49
    $region48: #{tpu_custom_call.1} parent=1 // pred_region
      _
    $region49: #{tpu_custom_call.1} parent=1 // pred_fallthru
      _
    // Predicated region
    $region50: #{tpu_custom_call.1} parent=1 // pred_check
      _
    $region51: #{tpu_custom_call.1} parent=1 // pred_check_branch
      %56 = sbr.rel (0) target = $region53
    $region52: #{tpu_custom_call.1} parent=1 // pred_region
      _
    $region53: #{tpu_custom_call.1} parent=1 // pred_fallthru
      _
    // Predicated region
    $region54: #{tpu_custom_call.1} parent=1 // pred_check
      _
    $region55: #{tpu_custom_call.1} parent=1 // pred_check_branch
      %58 = sbr.rel (0) target = $region57
    $region56: #{tpu_custom_call.1} parent=1 // pred_region
      _
    $region57: #{tpu_custom_call.1} parent=1 // pred_fallthru
      _
    // Predicated region
    $region58: #{tpu_custom_call.1} parent=1 // pred_check
      _
    $region59: #{tpu_custom_call.1} parent=1 // pred_check_branch
      %60 = sbr.rel (0) target = $region61
    $region60: #{tpu_custom_call.1} parent=1 // pred_region
      _
    $region61: #{tpu_custom_call.1} parent=1 // pred_fallthru
      _
    // Predicated region
    $region62: #{tpu_custom_call.1} parent=1 // pred_check
      _
    $region63: #{tpu_custom_call.1} parent=1 // pred_check_branch
      %62 = sbr.rel (0) target = $region65
    $region64: #{tpu_custom_call.1} parent=1 // pred_region
      %63 = dma.done [#allocation3], 8192
    $region65: #{tpu_custom_call.1} parent=1 // pred_fallthru
      _
    %v64 = vld [vmem:[%s0] sm:$0xf]
    %v65 = vld [vmem:[%s1] sm:$0xff]
    %v66 = vld [vmem:[%s1 + $0x8] sm:$0xff]
    %v67 = vld [vmem:[%s1 + $0x10] sm:$0xff]
    %v68 = vld [vmem:[%s1 + $0x18] sm:$0xff]
    %v69 = vld [vmem:[%s1 + $0x20] sm:$0xff]
    %v70 = vld [vmem:[%s1 + $0x28] sm:$0xff]
    %v71 = vld [vmem:[%s1 + $0x30] sm:$0xff]
    %v72 = vld [vmem:[%s1 + $0x38] sm:$0xff]
    %v73 = vld [vmem:[%s1 + $0x40] sm:$0xff]
    %v74 = vld [vmem:[%s1 + $0x48] sm:$0xff]
    %v75 = vld [vmem:[%s1 + $0x50] sm:$0xff]
    %v76 = vld [vmem:[%s1 + $0x58] sm:$0xff]
    %v77 = vld [vmem:[%s1 + $0x60] sm:$0xff]
    %v78 = vld [vmem:[%s1 + $0x68] sm:$0xff]
    %v79 = vld [vmem:[%s1 + $0x70] sm:$0xff]
    %v80 = vld [vmem:[%s1 + $0x78] sm:$0xff]
    %v81 = vld [vmem:[%s1 + $0x80] sm:$0xff]
    %v82 = vld [vmem:[%s1 + $0x88] sm:$0xff]
    %v83 = vld [vmem:[%s1 + $0x90] sm:$0xff]
    %v84 = vld [vmem:[%s1 + $0x98] sm:$0xff]
    %v85 = vld [vmem:[%s1 + $0xa0] sm:$0xff]
    %v86 = vld [vmem:[%s1 + $0xa8] sm:$0xff]
    %v87 = vld [vmem:[%s1 + $0xb0] sm:$0xff]
    %v88 = vld [vmem:[%s1 + $0xb8] sm:$0xff]
    %v89 = vld [vmem:[%s1 + $0xc0] sm:$0xff]
    %v90 = vld [vmem:[%s1 + $0xc8] sm:$0xff]
    %v91 = vld [vmem:[%s1 + $0xd0] sm:$0xff]
    %v92 = vld [vmem:[%s1 + $0xd8] sm:$0xff]
    %v93 = vld [vmem:[%s1 + $0xe0] sm:$0xff]
    %v94 = vld [vmem:[%s1 + $0xe8] sm:$0xff]
    %v95 = vld [vmem:[%s1 + $0xf0] sm:$0xff]
    %v96 = vld [vmem:[%s1 + $0xf8] sm:$0xff]
    %v97 = vld [vmem:[%s1 + $0x100] sm:$0xff]
    %v98 = vld [vmem:[%s1 + $0x108] sm:$0xff]
    %v99 = vld [vmem:[%s1 + $0x110] sm:$0xff]
    %v100 = vld [vmem:[%s1 + $0x118] sm:$0xff]
    %v101 = vld [vmem:[%s1 + $0x120] sm:$0xff]
    %v102 = vld [vmem:[%s1 + $0x128] sm:$0xff]
    %v103 = vld [vmem:[%s1 + $0x130] sm:$0xff]
    %v104 = vld [vmem:[%s1 + $0x138] sm:$0xff]
    %v105 = vld [vmem:[%s1 + $0x140] sm:$0xff]
    %v106 = vld [vmem:[%s1 + $0x148] sm:$0xff]
    %v107 = vld [vmem:[%s1 + $0x150] sm:$0xff]
    %v108 = vld [vmem:[%s1 + $0x158] sm:$0xff]
    %v109 = vld [vmem:[%s1 + $0x160] sm:$0xff]
    %v110 = vld [vmem:[%s1 + $0x168] sm:$0xff]
    %v111 = vld [vmem:[%s1 + $0x170] sm:$0xff]
    %v112 = vld [vmem:[%s1 + $0x178] sm:$0xff]
    %v113 = vld [vmem:[%s1 + $0x180] sm:$0xff]
    %v114 = vld [vmem:[%s1 + $0x188] sm:$0xff]
    %v115 = vld [vmem:[%s1 + $0x190] sm:$0xff]
    %v116 = vld [vmem:[%s1 + $0x198] sm:$0xff]
    %v117 = vld [vmem:[%s1 + $0x1a0] sm:$0xff]
    %v118 = vld [vmem:[%s1 + $0x1a8] sm:$0xff]
    %v119 = vld [vmem:[%s1 + $0x1b0] sm:$0xff]
    %v120 = vld [vmem:[%s1 + $0x1b8] sm:$0xff]
    %v121 = vld [vmem:[%s1 + $0x1c0] sm:$0xff]
    %v122 = vld [vmem:[%s1 + $0x1c8] sm:$0xff]
    %v123 = vld [vmem:[%s1 + $0x1d0] sm:$0xff]
    %v124 = vld [vmem:[%s1 + $0x1d8] sm:$0xff]
    %v125 = vld [vmem:[%s1 + $0x1e0] sm:$0xff]
    %v126 = vld [vmem:[%s1 + $0x1e8] sm:$0xff]
    %v127 = vld [vmem:[%s1 + $0x1f0] sm:$0xff]
    %v128 = vld [vmem:[%s1 + $0x1f8] sm:$0xff]
    %v129 = vld [vmem:[%s2] sm:$0x3]
    %v131 = vlaneseq
    %v132 = vshrl.u32 %v131, 7
    %v133 = vsub.s32 0, %v132
    %v134 = vrot.slane %v129, %v133
    %v135 = vlaneseq
    %v136 = vshrl.u32 %v135, 7
    %v137 = vsub.s32 1, %v136
    %v138 = vrot.slane %v129, %v137
    %v143 = vunpack.c.l.s4 1983009808
    %v144 = vunpack.c.0.s8 %v143
    %v145 = vlaneseq
    %v146 = vshrl.u32 %v145, 7
    %v147 = vsub.s32 %v144, %v146
    %v148 = vrot.slane %v64, %v147
    %v149 = vcombine.high %v148, %v148
    %152 = vmatprep.subr.mxu0 %v66
    %153 = vmatpush1.msra.mxu0 %v65
    %154 = vmatprep.subr.mxu0 %v68
    %155 = vmatpush1.msra.mxu0 %v67
    %156 = vmatprep.subr.mxu0 %v70
    %157 = vmatpush1.msra.mxu0 %v69
    %158 = vmatprep.subr.mxu0 %v72
    %159 = vmatpush1.msra.mxu0 %v71
    %160 = vmatprep.subr.mxu0 %v74
    %161 = vmatpush1.msra.mxu0 %v73
    %162 = vmatprep.subr.mxu0 %v76
    %163 = vmatpush1.msra.mxu0 %v75
    %164 = vmatprep.subr.mxu0 %v78
    %165 = vmatpush1.msra.mxu0 %v77
    %166 = vmatprep.subr.mxu0 %v80
    %167 = vmatpush1.msra.mxu0 %v79
    %168 = vmatprep.subr.mxu0 %v82
    %169 = vmatpush1.msra.mxu0 %v81
    %170 = vmatprep.subr.mxu0 %v84
    %171 = vmatpush1.msra.mxu0 %v83
    %172 = vmatprep.subr.mxu0 %v86
    %173 = vmatpush1.msra.mxu0 %v85
    %174 = vmatprep.subr.mxu0 %v88
    %175 = vmatpush1.msra.mxu0 %v87
    %176 = vmatprep.subr.mxu0 %v90
    %177 = vmatpush1.msra.mxu0 %v89
    %178 = vmatprep.subr.mxu0 %v92
    %179 = vmatpush1.msra.mxu0 %v91
    %180 = vmatprep.subr.mxu0 %v94
    %181 = vmatpush1.msra.mxu0 %v93
    %182 = vmatprep.subr.mxu0 %v96
    %183 = vmatpush1.msra.mxu0 %v95
    %184 = vmatprep.subr.mxu0 %v98
    %185 = vmatpush1.msra.mxu0 %v97
    %186 = vmatprep.subr.mxu0 %v100
    %187 = vmatpush1.msra.mxu0 %v99
    %188 = vmatprep.subr.mxu0 %v102
    %189 = vmatpush1.msra.mxu0 %v101
    %190 = vmatprep.subr.mxu0 %v104
    %191 = vmatpush1.msra.mxu0 %v103
    %192 = vmatprep.subr.mxu0 %v106
    %193 = vmatpush1.msra.mxu0 %v105
    %194 = vmatprep.subr.mxu0 %v108
    %195 = vmatpush1.msra.mxu0 %v107
    %196 = vmatprep.subr.mxu0 %v110
    %197 = vmatpush1.msra.mxu0 %v109
    %198 = vmatprep.subr.mxu0 %v112
    %199 = vmatpush1.msra.mxu0 %v111
    %200 = vmatprep.subr.mxu0 %v114
    %201 = vmatpush1.msra.mxu0 %v113
    %202 = vmatprep.subr.mxu0 %v116
    %203 = vmatpush1.msra.mxu0 %v115
    %204 = vmatprep.subr.mxu0 %v118
    %205 = vmatpush1.msra.mxu0 %v117
    %206 = vmatprep.subr.mxu0 %v120
    %207 = vmatpush1.msra.mxu0 %v119
    %208 = vmatprep.subr.mxu0 %v122
    %209 = vmatpush1.msra.mxu0 %v121
    %210 = vmatprep.subr.mxu0 %v124
    %211 = vmatpush1.msra.mxu0 %v123
    %212 = vmatprep.subr.mxu0 %v126
    %213 = vmatpush1.msra.mxu0 %v125
    %214 = vmatprep.subr.mxu0 %v128
    %215 = vmatpush1.msra.mxu0 %v127
    %216 = vmatprep.mubr.f32.mxu0 %v149
    %217 = vmatmul.mubr.f32.gmra.mrb[0].mxu0 %v148
    %v218 = vpop.f32.mrb[0].mxu0
    %v219 = vadd.f32 %v134, %v218
    %v220 = vpop.f32.mrb[0].mxu0
    %v221 = vadd.f32 %v138, %v220
    %222 = vdwg.mxu0
    %v223 = vld [vmem:[%s5] sm:$0xff]
    %v224 = vld [vmem:[%s5 + $0x8] sm:$0xff]
    %v225 = vld [vmem:[%s5 + $0x10] sm:$0xff]
    %v226 = vld [vmem:[%s5 + $0x18] sm:$0xff]
    %v227 = vld [vmem:[%s5 + $0x20] sm:$0xff]
    %v228 = vld [vmem:[%s5 + $0x28] sm:$0xff]
    %v229 = vld [vmem:[%s5 + $0x30] sm:$0xff]
    %v230 = vld [vmem:[%s5 + $0x38] sm:$0xff]
    %v231 = vld [vmem:[%s5 + $0x40] sm:$0xff]
    %v232 = vld [vmem:[%s5 + $0x48] sm:$0xff]
    %v233 = vld [vmem:[%s5 + $0x50] sm:$0xff]
    %v234 = vld [vmem:[%s5 + $0x58] sm:$0xff]
    %v235 = vld [vmem:[%s5 + $0x60] sm:$0xff]
    %v236 = vld [vmem:[%s5 + $0x68] sm:$0xff]
    %v237 = vld [vmem:[%s5 + $0x70] sm:$0xff]
    %v238 = vld [vmem:[%s5 + $0x78] sm:$0xff]
    %v239 = vld [vmem:[%s5 + $0x80] sm:$0xff]
    %v240 = vld [vmem:[%s5 + $0x88] sm:$0xff]
    %v241 = vld [vmem:[%s5 + $0x90] sm:$0xff]
    %v242 = vld [vmem:[%s5 + $0x98] sm:$0xff]
    %v243 = vld [vmem:[%s5 + $0xa0] sm:$0xff]
    %v244 = vld [vmem:[%s5 + $0xa8] sm:$0xff]
    %v245 = vld [vmem:[%s5 + $0xb0] sm:$0xff]
    %v246 = vld [vmem:[%s5 + $0xb8] sm:$0xff]
    %v247 = vld [vmem:[%s5 + $0xc0] sm:$0xff]
    %v248 = vld [vmem:[%s5 + $0xc8] sm:$0xff]
    %v249 = vld [vmem:[%s5 + $0xd0] sm:$0xff]
    %v250 = vld [vmem:[%s5 + $0xd8] sm:$0xff]
    %v251 = vld [vmem:[%s5 + $0xe0] sm:$0xff]
    %v252 = vld [vmem:[%s5 + $0xe8] sm:$0xff]
    %v253 = vld [vmem:[%s5 + $0xf0] sm:$0xff]
    %v254 = vld [vmem:[%s5 + $0xf8] sm:$0xff]
    %255 = vmatprep.subr.mxu0 0.0
    %256 = vmatpush1.msra.mxu0 %v223
    %257 = vmatprep.subr.mxu0 0.0
    %258 = vmatpush1.msra.mxu0 %v224
    %259 = vmatprep.subr.mxu0 0.0
    %260 = vmatpush1.msra.mxu0 %v225
    %261 = vmatprep.subr.mxu0 0.0
    %262 = vmatpush1.msra.mxu0 %v226
    %263 = vmatprep.subr.mxu0 0.0
    %264 = vmatpush1.msra.mxu0 %v227
    %265 = vmatprep.subr.mxu0 0.0
    %266 = vmatpush1.msra.mxu0 %v228
    %267 = vmatprep.subr.mxu0 0.0
    %268 = vmatpush1.msra.mxu0 %v229
    %269 = vmatprep.subr.mxu0 0.0
    %270 = vmatpush1.msra.mxu0 %v230
    %271 = vmatprep.subr.mxu0 0.0
    %272 = vmatpush1.msra.mxu0 %v231
    %273 = vmatprep.subr.mxu0 0.0
    %274 = vmatpush1.msra.mxu0 %v232
    %275 = vmatprep.subr.mxu0 0.0
    %276 = vmatpush1.msra.mxu0 %v233
    %277 = vmatprep.subr.mxu0 0.0
    %278 = vmatpush1.msra.mxu0 %v234
    %279 = vmatprep.subr.mxu0 0.0
    %280 = vmatpush1.msra.mxu0 %v235
    %281 = vmatprep.subr.mxu0 0.0
    %282 = vmatpush1.msra.mxu0 %v236
    %283 = vmatprep.subr.mxu0 0.0
    %284 = vmatpush1.msra.mxu0 %v237
    %285 = vmatprep.subr.mxu0 0.0
    %286 = vmatpush1.msra.mxu0 %v238
    %287 = vmatprep.subr.mxu0 0.0
    %288 = vmatpush1.msra.mxu0 %v239
    %289 = vmatprep.subr.mxu0 0.0
    %290 = vmatpush1.msra.mxu0 %v240
    %291 = vmatprep.subr.mxu0 0.0
    %292 = vmatpush1.msra.mxu0 %v241
    %293 = vmatprep.subr.mxu0 0.0
    %294 = vmatpush1.msra.mxu0 %v242
    %295 = vmatprep.subr.mxu0 0.0
    %296 = vmatpush1.msra.mxu0 %v243
    %297 = vmatprep.subr.mxu0 0.0
    %298 = vmatpush1.msra.mxu0 %v244
    %299 = vmatprep.subr.mxu0 0.0
    %300 = vmatpush1.msra.mxu0 %v245
    %301 = vmatprep.subr.mxu0 0.0
    %302 = vmatpush1.msra.mxu0 %v246
    %303 = vmatprep.subr.mxu0 0.0
    %304 = vmatpush1.msra.mxu0 %v247
    %305 = vmatprep.subr.mxu0 0.0
    %306 = vmatpush1.msra.mxu0 %v248
    %307 = vmatprep.subr.mxu0 0.0
    %308 = vmatpush1.msra.mxu0 %v249
    %309 = vmatprep.subr.mxu0 0.0
    %310 = vmatpush1.msra.mxu0 %v250
    %311 = vmatprep.subr.mxu0 0.0
    %312 = vmatpush1.msra.mxu0 %v251
    %313 = vmatprep.subr.mxu0 0.0
    %314 = vmatpush1.msra.mxu0 %v252
    %315 = vmatprep.subr.mxu0 0.0
    %316 = vmatpush1.msra.mxu0 %v253
    %317 = vmatprep.subr.mxu0 0.0
    %318 = vmatpush1.msra.mxu0 %v254
    %319 = vmatprep.mubr.f32.mxu0 %v221
    %320 = vmatmul.mubr.f32.gmra.mrb[0].mxu0 %v219
    %v321 = vpop.f32.mrb[0].mxu0
    %v322 = vadd.f32 0.0, %v321
    %v323 = vpop.f32.mrb[0].mxu0
    %324 = vdwg.mxu0
    %vm325 = vcmask 123904
    %v326 = vsel %vm325, %v322, 0.0
    %v327 = vrot.slane %v326, 4
    %v328 = vadd.f32 %v326, %v327
    %v329 = vrot.slane %v328, 2
    %v330 = vadd.f32 %v328, %v329
    %v331 = vrot.slane %v330, 1
    %v332 = vadd.f32 %v330, %v331
    %v333 = vrcp.pop 32.0
    %v334 = vmul.f32 %v332, %v333
    %v335 = vld [vmem:[%s6] sm:$0xff]
    %v336 = vld [vmem:[%s6 + $0x8] sm:$0xff]
    %v337 = vld [vmem:[%s6 + $0x10] sm:$0xff]
    %v338 = vld [vmem:[%s6 + $0x18] sm:$0xff]
    %vm339 = vcmask 130048
    %v341 = vsel %vm339, %v334, 0
    %343 = vmatprep.subr.mxu0 %v336
    %344 = vmatpush1.msra.mxu0 %v335
    %345 = vmatprep.subr.mxu0 %v338
    %346 = vmatpush1.msra.mxu0 %v337
    %347 = vmatprep.subr.mxu0 0.0
    %348 = vmatpush1.msra.mxu0 0.0
    %349 = vmatprep.subr.mxu0 0.0
    %350 = vmatpush1.msra.mxu0 0.0
    %351 = vmatprep.subr.mxu0 0.0
    %352 = vmatpush1.msra.mxu0 0.0
    %353 = vmatprep.subr.mxu0 0.0
    %354 = vmatpush1.msra.mxu0 0.0
    %355 = vmatprep.subr.mxu0 0.0
    %356 = vmatpush1.msra.mxu0 0.0
    %357 = vmatprep.subr.mxu0 0.0
    %358 = vmatpush1.msra.mxu0 0.0
    %359 = vmatprep.subr.mxu0 0.0
    %360 = vmatpush1.msra.mxu0 0.0
    %361 = vmatprep.subr.mxu0 0.0
    %362 = vmatpush1.msra.mxu0 0.0
    %363 = vmatprep.subr.mxu0 0.0
    %364 = vmatpush1.msra.mxu0 0.0
    %365 = vmatprep.subr.mxu0 0.0
    %366 = vmatpush1.msra.mxu0 0.0
    %367 = vmatprep.subr.mxu0 0.0
    %368 = vmatpush1.msra.mxu0 0.0
    %369 = vmatprep.subr.mxu0 0.0
    %370 = vmatpush1.msra.mxu0 0.0
    %371 = vmatprep.subr.mxu0 0.0
    %372 = vmatpush1.msra.mxu0 0.0
    %373 = vmatprep.subr.mxu0 0.0
    %374 = vmatpush1.msra.mxu0 0.0
    %375 = vmatprep.subr.mxu0 0.0
    %376 = vmatpush1.msra.mxu0 0.0
    %377 = vmatprep.subr.mxu0 0.0
    %378 = vmatpush1.msra.mxu0 0.0
    %379 = vmatprep.subr.mxu0 0.0
    %380 = vmatpush1.msra.mxu0 0.0
    %381 = vmatprep.subr.mxu0 0.0
    %382 = vmatpush1.msra.mxu0 0.0
    %383 = vmatprep.subr.mxu0 0.0
    %384 = vmatpush1.msra.mxu0 0.0
    %385 = vmatprep.subr.mxu0 0.0
    %386 = vmatpush1.msra.mxu0 0.0
    %387 = vmatprep.subr.mxu0 0.0
    %388 = vmatpush1.msra.mxu0 0.0
    %389 = vmatprep.subr.mxu0 0.0
    %390 = vmatpush1.msra.mxu0 0.0
    %391 = vmatprep.subr.mxu0 0.0
    %392 = vmatpush1.msra.mxu0 0.0
    %393 = vmatprep.subr.mxu0 0.0
    %394 = vmatpush1.msra.mxu0 0.0
    %395 = vmatprep.subr.mxu0 0.0
    %396 = vmatpush1.msra.mxu0 0.0
    %397 = vmatprep.subr.mxu0 0.0
    %398 = vmatpush1.msra.mxu0 0.0
    %399 = vmatprep.subr.mxu0 0.0
    %400 = vmatpush1.msra.mxu0 0.0
    %401 = vmatprep.subr.mxu0 0.0
    %402 = vmatpush1.msra.mxu0 0.0
    %403 = vmatprep.subr.mxu0 0.0
    %404 = vmatpush1.msra.mxu0 0.0
    %405 = vmatprep.subr.mxu0 0.0
    %406 = vmatpush1.msra.mxu0 0.0
    %407 = vmatprep.mubr.f32.mxu0 0.0
    %408 = vmatmul.mubr.f32.gmra.mrb[0].mxu0 %v341
    %v409 = vpop.f32.mrb[0].mxu0
    %v410 = vadd.f32 0.0, %v409
    %v411 = vpop.f32.mrb[0].mxu0
    %v412 = vadd.f32 0.0, %v411
    %413 = vdwg.mxu0
    %v414 = vlaneseq
    %v415 = vshrl.u32 %v414, 7
    %v416 = vsub.s32 0, %v415
    %v417 = vrot.slane %v410, %v416
    %v418 = vlaneseq
    %v419 = vshrl.u32 %v418, 7
    %v420 = vsub.s32 0, %v419
    %v421 = vrot.slane %v412, %v420
    %v422 = vsub.f32 %v219, %v417
    %v423 = vsub.f32 %v221, %v421
    %v424 = vmul.f32 %v422, %v422
    %v425 = vmul.f32 %v423, %v423
    %426 = vmatprep.subr.mxu0 0.0
    %427 = vmatpush1.msra.mxu0 %v223
    %428 = vmatprep.subr.mxu0 0.0
    %429 = vmatpush1.msra.mxu0 %v224
    %430 = vmatprep.subr.mxu0 0.0
    %431 = vmatpush1.msra.mxu0 %v225
    %432 = vmatprep.subr.mxu0 0.0
    %433 = vmatpush1.msra.mxu0 %v226
    %434 = vmatprep.subr.mxu0 0.0
    %435 = vmatpush1.msra.mxu0 %v227
    %436 = vmatprep.subr.mxu0 0.0
    %437 = vmatpush1.msra.mxu0 %v228
    %438 = vmatprep.subr.mxu0 0.0
    %439 = vmatpush1.msra.mxu0 %v229
    %440 = vmatprep.subr.mxu0 0.0
    %441 = vmatpush1.msra.mxu0 %v230
    %442 = vmatprep.subr.mxu0 0.0
    %443 = vmatpush1.msra.mxu0 %v231
    %444 = vmatprep.subr.mxu0 0.0
    %445 = vmatpush1.msra.mxu0 %v232
    %446 = vmatprep.subr.mxu0 0.0
    %447 = vmatpush1.msra.mxu0 %v233
    %448 = vmatprep.subr.mxu0 0.0
    %449 = vmatpush1.msra.mxu0 %v234
    %450 = vmatprep.subr.mxu0 0.0
    %451 = vmatpush1.msra.mxu0 %v235
    %452 = vmatprep.subr.mxu0 0.0
    %453 = vmatpush1.msra.mxu0 %v236
    %454 = vmatprep.subr.mxu0 0.0
    %455 = vmatpush1.msra.mxu0 %v237
    %456 = vmatprep.subr.mxu0 0.0
    %457 = vmatpush1.msra.mxu0 %v238
    %458 = vmatprep.subr.mxu0 0.0
    %459 = vmatpush1.msra.mxu0 %v239
    %460 = vmatprep.subr.mxu0 0.0
    %461 = vmatpush1.msra.mxu0 %v240
    %462 = vmatprep.subr.mxu0 0.0
    %463 = vmatpush1.msra.mxu0 %v241
    %464 = vmatprep.subr.mxu0 0.0
    %465 = vmatpush1.msra.mxu0 %v242
    %466 = vmatprep.subr.mxu0 0.0
    %467 = vmatpush1.msra.mxu0 %v243
    %468 = vmatprep.subr.mxu0 0.0
    %469 = vmatpush1.msra.mxu0 %v244
    %470 = vmatprep.subr.mxu0 0.0
    %471 = vmatpush1.msra.mxu0 %v245
    %472 = vmatprep.subr.mxu0 0.0
    %473 = vmatpush1.msra.mxu0 %v246
    %474 = vmatprep.subr.mxu0 0.0
    %475 = vmatpush1.msra.mxu0 %v247
    %476 = vmatprep.subr.mxu0 0.0
    %477 = vmatpush1.msra.mxu0 %v248
    %478 = vmatprep.subr.mxu0 0.0
    %479 = vmatpush1.msra.mxu0 %v249
    %480 = vmatprep.subr.mxu0 0.0
    %481 = vmatpush1.msra.mxu0 %v250
    %482 = vmatprep.subr.mxu0 0.0
    %483 = vmatpush1.msra.mxu0 %v251
    %484 = vmatprep.subr.mxu0 0.0
    %485 = vmatpush1.msra.mxu0 %v252
    %486 = vmatprep.subr.mxu0 0.0
    %487 = vmatpush1.msra.mxu0 %v253
    %488 = vmatprep.subr.mxu0 0.0
    %489 = vmatpush1.msra.mxu0 %v254
    %490 = vmatprep.mubr.f32.mxu0 %v425
    %491 = vmatmul.mubr.f32.gmra.mrb[0].mxu0 %v424
    %v492 = vpop.f32.mrb[0].mxu0
    %v493 = vadd.f32 0.0, %v492
    %v494 = vpop.f32.mrb[0].mxu0
    %495 = vdwg.mxu0
    %v496 = vsel %vm325, %v493, 0.0
    %v497 = vrot.slane %v496, 4
    %v498 = vadd.f32 %v496, %v497
    %v499 = vrot.slane %v498, 2
    %v500 = vadd.f32 %v498, %v499
    %v501 = vrot.slane %v500, 1
    %v502 = vadd.f32 %v500, %v501
    %v503 = vmul.f32 %v502, %v333
    %v504 = vadd.f32 %v503, 1e-05
    %v505 = vrsqrt.pop %v504
    %v507 = vsel %vm339, %v505, 0
    %509 = vmatprep.subr.mxu0 %v336
    %510 = vmatpush1.msra.mxu0 %v335
    %511 = vmatprep.subr.mxu0 %v338
    %512 = vmatpush1.msra.mxu0 %v337
    %513 = vmatprep.subr.mxu0 0.0
    %514 = vmatpush1.msra.mxu0 0.0
    %515 = vmatprep.subr.mxu0 0.0
    %516 = vmatpush1.msra.mxu0 0.0
    %517 = vmatprep.subr.mxu0 0.0
    %518 = vmatpush1.msra.mxu0 0.0
    %519 = vmatprep.subr.mxu0 0.0
    %520 = vmatpush1.msra.mxu0 0.0
    %521 = vmatprep.subr.mxu0 0.0
    %522 = vmatpush1.msra.mxu0 0.0
    %523 = vmatprep.subr.mxu0 0.0
    %524 = vmatpush1.msra.mxu0 0.0
    %525 = vmatprep.subr.mxu0 0.0
    %526 = vmatpush1.msra.mxu0 0.0
    %527 = vmatprep.subr.mxu0 0.0
    %528 = vmatpush1.msra.mxu0 0.0
    %529 = vmatprep.subr.mxu0 0.0
    %530 = vmatpush1.msra.mxu0 0.0
    %531 = vmatprep.subr.mxu0 0.0
    %532 = vmatpush1.msra.mxu0 0.0
    %533 = vmatprep.subr.mxu0 0.0
    %534 = vmatpush1.msra.mxu0 0.0
    %535 = vmatprep.subr.mxu0 0.0
    %536 = vmatpush1.msra.mxu0 0.0
    %537 = vmatprep.subr.mxu0 0.0
    %538 = vmatpush1.msra.mxu0 0.0
    %539 = vmatprep.subr.mxu0 0.0
    %540 = vmatpush1.msra.mxu0 0.0
    %541 = vmatprep.subr.mxu0 0.0
    %542 = vmatpush1.msra.mxu0 0.0
    %543 = vmatprep.subr.mxu0 0.0
    %544 = vmatpush1.msra.mxu0 0.0
    %545 = vmatprep.subr.mxu0 0.0
    %546 = vmatpush1.msra.mxu0 0.0
    %547 = vmatprep.subr.mxu0 0.0
    %548 = vmatpush1.msra.mxu0 0.0
    %549 = vmatprep.subr.mxu0 0.0
    %550 = vmatpush1.msra.mxu0 0.0
    %551 = vmatprep.subr.mxu0 0.0
    %552 = vmatpush1.msra.mxu0 0.0
    %553 = vmatprep.subr.mxu0 0.0
    %554 = vmatpush1.msra.mxu0 0.0
    %555 = vmatprep.subr.mxu0 0.0
    %556 = vmatpush1.msra.mxu0 0.0
    %557 = vmatprep.subr.mxu0 0.0
    %558 = vmatpush1.msra.mxu0 0.0
    %559 = vmatprep.subr.mxu0 0.0
    %560 = vmatpush1.msra.mxu0 0.0
    %561 = vmatprep.subr.mxu0 0.0
    %562 = vmatpush1.msra.mxu0 0.0
    %563 = vmatprep.subr.mxu0 0.0
    %564 = vmatpush1.msra.mxu0 0.0
    %565 = vmatprep.subr.mxu0 0.0
    %566 = vmatpush1.msra.mxu0 0.0
    %567 = vmatprep.subr.mxu0 0.0
    %568 = vmatpush1.msra.mxu0 0.0
    %569 = vmatprep.subr.mxu0 0.0
    %570 = vmatpush1.msra.mxu0 0.0
    %571 = vmatprep.subr.mxu0 0.0
    %572 = vmatpush1.msra.mxu0 0.0
    %573 = vmatprep.mubr.f32.mxu0 0.0
    %574 = vmatmul.mubr.f32.gmra.mrb[0].mxu0 %v507
    %v575 = vpop.f32.mrb[0].mxu0
    %v576 = vadd.f32 0.0, %v575
    %v577 = vpop.f32.mrb[0].mxu0
    %v578 = vadd.f32 0.0, %v577
    %579 = vdwg.mxu0
    %v580 = vlaneseq
    %v581 = vshrl.u32 %v580, 7
    %v582 = vsub.s32 0, %v581
    %v583 = vrot.slane %v576, %v582
    %v584 = vlaneseq
    %v585 = vshrl.u32 %v584, 7
    %v586 = vsub.s32 0, %v585
    %v587 = vrot.slane %v578, %v586
    %v588 = vmul.f32 %v422, %v583
    %v589 = vmul.f32 %v423, %v587
    %v590 = vld [vmem:[%s3] sm:$0x3]
    %v592 = vlaneseq
    %v593 = vshrl.u32 %v592, 7
    %v594 = vsub.s32 0, %v593
    %v595 = vrot.slane %v590, %v594
    %v596 = vlaneseq
    %v597 = vshrl.u32 %v596, 7
    %v598 = vsub.s32 1, %v597
    %v599 = vrot.slane %v590, %v598
    %v602 = vmul.f32 %v588, %v595
    %v603 = vmul.f32 %v589, %v599
    %v604 = vld [vmem:[%s4] sm:$0x3]
    %v606 = vlaneseq
    %v607 = vshrl.u32 %v606, 7
    %v608 = vsub.s32 0, %v607
    %v609 = vrot.slane %v604, %v608
    %v610 = vlaneseq
    %v611 = vshrl.u32 %v610, 7
    %v612 = vsub.s32 1, %v611
    %v613 = vrot.slane %v604, %v612
    %v616 = vadd.f32 %v602, %v609
    %v617 = vadd.f32 %v603, %v613
    %v618 = vmax.f32 %v616, 0.0
    %v619 = vmax.f32 %v617, 0.0
    %v620 = vld [vmem:[#allocation2] sm:$0xff]
    %v621 = vld [vmem:[#allocation2 + $0x8] sm:$0xff]
    %v622 = vld [vmem:[#allocation2 + $0x10] sm:$0xff]
    %v623 = vld [vmem:[#allocation2 + $0x18] sm:$0xff]
    %v624 = vld [vmem:[#allocation2 + $0x20] sm:$0xff]
    %v625 = vld [vmem:[#allocation2 + $0x28] sm:$0xff]
    %v626 = vld [vmem:[#allocation2 + $0x30] sm:$0xff]
    %v627 = vld [vmem:[#allocation2 + $0x38] sm:$0xff]
    %v628 = vld [vmem:[#allocation2 + $0x40] sm:$0xff]
    %v629 = vld [vmem:[#allocation2 + $0x48] sm:$0xff]
    %v630 = vld [vmem:[#allocation2 + $0x50] sm:$0xff]
    %v631 = vld [vmem:[#allocation2 + $0x58] sm:$0xff]
    %v632 = vld [vmem:[#allocation2 + $0x60] sm:$0xff]
    %v633 = vld [vmem:[#allocation2 + $0x68] sm:$0xff]
    %v634 = vld [vmem:[#allocation2 + $0x70] sm:$0xff]
    %v635 = vld [vmem:[#allocation2 + $0x78] sm:$0xff]
    %v636 = vld [vmem:[#allocation2 + $0x80] sm:$0xff]
    %v637 = vld [vmem:[#allocation2 + $0x88] sm:$0xff]
    %v638 = vld [vmem:[#allocation2 + $0x90] sm:$0xff]
    %v639 = vld [vmem:[#allocation2 + $0x98] sm:$0xff]
    %v640 = vld [vmem:[#allocation2 + $0xa0] sm:$0xff]
    %v641 = vld [vmem:[#allocation2 + $0xa8] sm:$0xff]
    %v642 = vld [vmem:[#allocation2 + $0xb0] sm:$0xff]
    %v643 = vld [vmem:[#allocation2 + $0xb8] sm:$0xff]
    %v644 = vld [vmem:[#allocation2 + $0xc0] sm:$0xff]
    %v645 = vld [vmem:[#allocation2 + $0xc8] sm:$0xff]
    %v646 = vld [vmem:[#allocation2 + $0xd0] sm:$0xff]
    %v647 = vld [vmem:[#allocation2 + $0xd8] sm:$0xff]
    %v648 = vld [vmem:[#allocation2 + $0xe0] sm:$0xff]
    %v649 = vld [vmem:[#allocation2 + $0xe8] sm:$0xff]
    %v650 = vld [vmem:[#allocation2 + $0xf0] sm:$0xff]
    %v651 = vld [vmem:[#allocation2 + $0xf8] sm:$0xff]
    %v652 = vld [vmem:[#allocation2 + $0x100] sm:$0xff]
    %v653 = vld [vmem:[#allocation2 + $0x108] sm:$0xff]
    %v654 = vld [vmem:[#allocation2 + $0x110] sm:$0xff]
    %v655 = vld [vmem:[#allocation2 + $0x118] sm:$0xff]
    %v656 = vld [vmem:[#allocation2 + $0x120] sm:$0xff]
    %v657 = vld [vmem:[#allocation2 + $0x128] sm:$0xff]
    %v658 = vld [vmem:[#allocation2 + $0x130] sm:$0xff]
    %v659 = vld [vmem:[#allocation2 + $0x138] sm:$0xff]
    %v660 = vld [vmem:[#allocation2 + $0x140] sm:$0xff]
    %v661 = vld [vmem:[#allocation2 + $0x148] sm:$0xff]
    %v662 = vld [vmem:[#allocation2 + $0x150] sm:$0xff]
    %v663 = vld [vmem:[#allocation2 + $0x158] sm:$0xff]
    %v664 = vld [vmem:[#allocation2 + $0x160] sm:$0xff]
    %v665 = vld [vmem:[#allocation2 + $0x168] sm:$0xff]
    %v666 = vld [vmem:[#allocation2 + $0x170] sm:$0xff]
    %v667 = vld [vmem:[#allocation2 + $0x178] sm:$0xff]
    %v668 = vld [vmem:[#allocation2 + $0x180] sm:$0xff]
    %v669 = vld [vmem:[#allocation2 + $0x188] sm:$0xff]
    %v670 = vld [vmem:[#allocation2 + $0x190] sm:$0xff]
    %v671 = vld [vmem:[#allocation2 + $0x198] sm:$0xff]
    %v672 = vld [vmem:[#allocation2 + $0x1a0] sm:$0xff]
    %v673 = vld [vmem:[#allocation2 + $0x1a8] sm:$0xff]
    %v674 = vld [vmem:[#allocation2 + $0x1b0] sm:$0xff]
    %v675 = vld [vmem:[#allocation2 + $0x1b8] sm:$0xff]
    %v676 = vld [vmem:[#allocation2 + $0x1c0] sm:$0xff]
    %v677 = vld [vmem:[#allocation2 + $0x1c8] sm:$0xff]
    %v678 = vld [vmem:[#allocation2 + $0x1d0] sm:$0xff]
    %v679 = vld [vmem:[#allocation2 + $0x1d8] sm:$0xff]
    %v680 = vld [vmem:[#allocation2 + $0x1e0] sm:$0xff]
    %v681 = vld [vmem:[#allocation2 + $0x1e8] sm:$0xff]
    %v682 = vld [vmem:[#allocation2 + $0x1f0] sm:$0xff]
    %v683 = vld [vmem:[#allocation2 + $0x1f8] sm:$0xff]
    %v684 = vld [vmem:[%s8] sm:$0x3]
    %v686 = vlaneseq
    %v687 = vshrl.u32 %v686, 7
    %v688 = vsub.s32 0, %v687
    %v689 = vrot.slane %v684, %v688
    %v690 = vlaneseq
    %v691 = vshrl.u32 %v690, 7
    %v692 = vsub.s32 1, %v691
    %v693 = vrot.slane %v684, %v692
    %696 = vmatprep.subr.mxu0 %v621
    %697 = vmatpush1.msra.mxu0 %v620
    %698 = vmatprep.subr.mxu0 %v623
    %699 = vmatpush1.msra.mxu0 %v622
    %700 = vmatprep.subr.mxu0 %v625
    %701 = vmatpush1.msra.mxu0 %v624
    %702 = vmatprep.subr.mxu0 %v627
    %703 = vmatpush1.msra.mxu0 %v626
    %704 = vmatprep.subr.mxu0 %v629
    %705 = vmatpush1.msra.mxu0 %v628
    %706 = vmatprep.subr.mxu0 %v631
    %707 = vmatpush1.msra.mxu0 %v630
    %708 = vmatprep.subr.mxu0 %v633
    %709 = vmatpush1.msra.mxu0 %v632
    %710 = vmatprep.subr.mxu0 %v635
    %711 = vmatpush1.msra.mxu0 %v634
    %712 = vmatprep.subr.mxu0 %v637
    %713 = vmatpush1.msra.mxu0 %v636
    %714 = vmatprep.subr.mxu0 %v639
    %715 = vmatpush1.msra.mxu0 %v638
    %716 = vmatprep.subr.mxu0 %v641
    %717 = vmatpush1.msra.mxu0 %v640
    %718 = vmatprep.subr.mxu0 %v643
    %719 = vmatpush1.msra.mxu0 %v642
    %720 = vmatprep.subr.mxu0 %v645
    %721 = vmatpush1.msra.mxu0 %v644
    %722 = vmatprep.subr.mxu0 %v647
    %723 = vmatpush1.msra.mxu0 %v646
    %724 = vmatprep.subr.mxu0 %v649
    %725 = vmatpush1.msra.mxu0 %v648
    %726 = vmatprep.subr.mxu0 %v651
    %727 = vmatpush1.msra.mxu0 %v650
    %728 = vmatprep.subr.mxu0 %v653
    %729 = vmatpush1.msra.mxu0 %v652
    %730 = vmatprep.subr.mxu0 %v655
    %731 = vmatpush1.msra.mxu0 %v654
    %732 = vmatprep.subr.mxu0 %v657
    %733 = vmatpush1.msra.mxu0 %v656
    %734 = vmatprep.subr.mxu0 %v659
    %735 = vmatpush1.msra.mxu0 %v658
    %736 = vmatprep.subr.mxu0 %v661
    %737 = vmatpush1.msra.mxu0 %v660
    %738 = vmatprep.subr.mxu0 %v663
    %739 = vmatpush1.msra.mxu0 %v662
    %740 = vmatprep.subr.mxu0 %v665
    %741 = vmatpush1.msra.mxu0 %v664
    %742 = vmatprep.subr.mxu0 %v667
    %743 = vmatpush1.msra.mxu0 %v666
    %744 = vmatprep.subr.mxu0 %v669
    %745 = vmatpush1.msra.mxu0 %v668
    %746 = vmatprep.subr.mxu0 %v671
    %747 = vmatpush1.msra.mxu0 %v670
    %748 = vmatprep.subr.mxu0 %v673
    %749 = vmatpush1.msra.mxu0 %v672
    %750 = vmatprep.subr.mxu0 %v675
    %751 = vmatpush1.msra.mxu0 %v674
    %752 = vmatprep.subr.mxu0 %v677
    %753 = vmatpush1.msra.mxu0 %v676
    %754 = vmatprep.subr.mxu0 %v679
    %755 = vmatpush1.msra.mxu0 %v678
    %756 = vmatprep.subr.mxu0 %v681
    %757 = vmatpush1.msra.mxu0 %v680
    %758 = vmatprep.subr.mxu0 %v683
    %759 = vmatpush1.msra.mxu0 %v682
    %760 = vmatprep.mubr.f32.mxu0 %v619
    %761 = vmatmul.mubr.f32.gmra.mrb[0].mxu0 %v618
    %v762 = vpop.f32.mrb[0].mxu0
    %v763 = vadd.f32 %v689, %v762
    %v764 = vpop.f32.mrb[0].mxu0
    %v765 = vadd.f32 %v693, %v764
    %766 = vdwg.mxu0
    %v767 = vld [vmem:[%s11] sm:$0xff]
    %v768 = vld [vmem:[%s11 + $0x8] sm:$0xff]
    %v769 = vld [vmem:[%s11 + $0x10] sm:$0xff]
    %v770 = vld [vmem:[%s11 + $0x18] sm:$0xff]
    %v771 = vld [vmem:[%s11 + $0x20] sm:$0xff]
    %v772 = vld [vmem:[%s11 + $0x28] sm:$0xff]
    %v773 = vld [vmem:[%s11 + $0x30] sm:$0xff]
    %v774 = vld [vmem:[%s11 + $0x38] sm:$0xff]
    %v775 = vld [vmem:[%s11 + $0x40] sm:$0xff]
    %v776 = vld [vmem:[%s11 + $0x48] sm:$0xff]
    %v777 = vld [vmem:[%s11 + $0x50] sm:$0xff]
    %v778 = vld [vmem:[%s11 + $0x58] sm:$0xff]
    %v779 = vld [vmem:[%s11 + $0x60] sm:$0xff]
    %v780 = vld [vmem:[%s11 + $0x68] sm:$0xff]
    %v781 = vld [vmem:[%s11 + $0x70] sm:$0xff]
    %v782 = vld [vmem:[%s11 + $0x78] sm:$0xff]
    %v783 = vld [vmem:[%s11 + $0x80] sm:$0xff]
    %v784 = vld [vmem:[%s11 + $0x88] sm:$0xff]
    %v785 = vld [vmem:[%s11 + $0x90] sm:$0xff]
    %v786 = vld [vmem:[%s11 + $0x98] sm:$0xff]
    %v787 = vld [vmem:[%s11 + $0xa0] sm:$0xff]
    %v788 = vld [vmem:[%s11 + $0xa8] sm:$0xff]
    %v789 = vld [vmem:[%s11 + $0xb0] sm:$0xff]
    %v790 = vld [vmem:[%s11 + $0xb8] sm:$0xff]
    %v791 = vld [vmem:[%s11 + $0xc0] sm:$0xff]
    %v792 = vld [vmem:[%s11 + $0xc8] sm:$0xff]
    %v793 = vld [vmem:[%s11 + $0xd0] sm:$0xff]
    %v794 = vld [vmem:[%s11 + $0xd8] sm:$0xff]
    %v795 = vld [vmem:[%s11 + $0xe0] sm:$0xff]
    %v796 = vld [vmem:[%s11 + $0xe8] sm:$0xff]
    %v797 = vld [vmem:[%s11 + $0xf0] sm:$0xff]
    %v798 = vld [vmem:[%s11 + $0xf8] sm:$0xff]
    %799 = vmatprep.subr.mxu0 0.0
    %800 = vmatpush1.msra.mxu0 %v767
    %801 = vmatprep.subr.mxu0 0.0
    %802 = vmatpush1.msra.mxu0 %v768
    %803 = vmatprep.subr.mxu0 0.0
    %804 = vmatpush1.msra.mxu0 %v769
    %805 = vmatprep.subr.mxu0 0.0
    %806 = vmatpush1.msra.mxu0 %v770
    %807 = vmatprep.subr.mxu0 0.0
    %808 = vmatpush1.msra.mxu0 %v771
    %809 = vmatprep.subr.mxu0 0.0
    %810 = vmatpush1.msra.mxu0 %v772
    %811 = vmatprep.subr.mxu0 0.0
    %812 = vmatpush1.msra.mxu0 %v773
    %813 = vmatprep.subr.mxu0 0.0
    %814 = vmatpush1.msra.mxu0 %v774
    %815 = vmatprep.subr.mxu0 0.0
    %816 = vmatpush1.msra.mxu0 %v775
    %817 = vmatprep.subr.mxu0 0.0
    %818 = vmatpush1.msra.mxu0 %v776
    %819 = vmatprep.subr.mxu0 0.0
    %820 = vmatpush1.msra.mxu0 %v777
    %821 = vmatprep.subr.mxu0 0.0
    %822 = vmatpush1.msra.mxu0 %v778
    %823 = vmatprep.subr.mxu0 0.0
    %824 = vmatpush1.msra.mxu0 %v779
    %825 = vmatprep.subr.mxu0 0.0
    %826 = vmatpush1.msra.mxu0 %v780
    %827 = vmatprep.subr.mxu0 0.0
    %828 = vmatpush1.msra.mxu0 %v781
    %829 = vmatprep.subr.mxu0 0.0
    %830 = vmatpush1.msra.mxu0 %v782
    %831 = vmatprep.subr.mxu0 0.0
    %832 = vmatpush1.msra.mxu0 %v783
    %833 = vmatprep.subr.mxu0 0.0
    %834 = vmatpush1.msra.mxu0 %v784
    %835 = vmatprep.subr.mxu0 0.0
    %836 = vmatpush1.msra.mxu0 %v785
    %837 = vmatprep.subr.mxu0 0.0
    %838 = vmatpush1.msra.mxu0 %v786
    %839 = vmatprep.subr.mxu0 0.0
    %840 = vmatpush1.msra.mxu0 %v787
    %841 = vmatprep.subr.mxu0 0.0
    %842 = vmatpush1.msra.mxu0 %v788
    %843 = vmatprep.subr.mxu0 0.0
    %844 = vmatpush1.msra.mxu0 %v789
    %845 = vmatprep.subr.mxu0 0.0
    %846 = vmatpush1.msra.mxu0 %v790
    %847 = vmatprep.subr.mxu0 0.0
    %848 = vmatpush1.msra.mxu0 %v791
    %849 = vmatprep.subr.mxu0 0.0
    %850 = vmatpush1.msra.mxu0 %v792
    %851 = vmatprep.subr.mxu0 0.0
    %852 = vmatpush1.msra.mxu0 %v793
    %853 = vmatprep.subr.mxu0 0.0
    %854 = vmatpush1.msra.mxu0 %v794
    %855 = vmatprep.subr.mxu0 0.0
    %856 = vmatpush1.msra.mxu0 %v795
    %857 = vmatprep.subr.mxu0 0.0
    %858 = vmatpush1.msra.mxu0 %v796
    %859 = vmatprep.subr.mxu0 0.0
    %860 = vmatpush1.msra.mxu0 %v797
    %861 = vmatprep.subr.mxu0 0.0
    %862 = vmatpush1.msra.mxu0 %v798
    %863 = vmatprep.mubr.f32.mxu0 %v765
    %864 = vmatmul.mubr.f32.gmra.mrb[0].mxu0 %v763
    %v865 = vpop.f32.mrb[0].mxu0
    %v866 = vadd.f32 0.0, %v865
    %v867 = vpop.f32.mrb[0].mxu0
    %868 = vdwg.mxu0
    %vm869 = vcmask 58368
    %v870 = vsel %vm869, %v866, 0.0
    %v871 = vrot.slane %v870, 4
    %v872 = vadd.f32 %v870, %v871
    %v873 = vrot.slane %v872, 2
    %v874 = vadd.f32 %v872, %v873
    %v875 = vrot.slane %v874, 1
    %v876 = vadd.f32 %v874, %v875
    %v877 = vrcp.pop 64.0
    %v878 = vmul.f32 %v876, %v877
    %v879 = vld [vmem:[%s12] sm:$0xff]
    %v880 = vld [vmem:[%s12 + $0x8] sm:$0xff]
    %vm881 = vcmask 64512
    %v883 = vsel %vm881, %v878, 0
    %885 = vmatprep.subr.mxu0 %v880
    %886 = vmatpush1.msra.mxu0 %v879
    %887 = vmatprep.subr.mxu0 0.0
    %888 = vmatpush1.msra.mxu0 0.0
    %889 = vmatprep.subr.mxu0 0.0
    %890 = vmatpush1.msra.mxu0 0.0
    %891 = vmatprep.subr.mxu0 0.0
    %892 = vmatpush1.msra.mxu0 0.0
    %893 = vmatprep.subr.mxu0 0.0
    %894 = vmatpush1.msra.mxu0 0.0
    %895 = vmatprep.subr.mxu0 0.0
    %896 = vmatpush1.msra.mxu0 0.0
    %897 = vmatprep.subr.mxu0 0.0
    %898 = vmatpush1.msra.mxu0 0.0
    %899 = vmatprep.subr.mxu0 0.0
    %900 = vmatpush1.msra.mxu0 0.0
    %901 = vmatprep.subr.mxu0 0.0
    %902 = vmatpush1.msra.mxu0 0.0
    %903 = vmatprep.subr.mxu0 0.0
    %904 = vmatpush1.msra.mxu0 0.0
    %905 = vmatprep.subr.mxu0 0.0
    %906 = vmatpush1.msra.mxu0 0.0
    %907 = vmatprep.subr.mxu0 0.0
    %908 = vmatpush1.msra.mxu0 0.0
    %909 = vmatprep.subr.mxu0 0.0
    %910 = vmatpush1.msra.mxu0 0.0
    %911 = vmatprep.subr.mxu0 0.0
    %912 = vmatpush1.msra.mxu0 0.0
    %913 = vmatprep.subr.mxu0 0.0
    %914 = vmatpush1.msra.mxu0 0.0
    %915 = vmatprep.subr.mxu0 0.0
    %916 = vmatpush1.msra.mxu0 0.0
    %917 = vmatprep.subr.mxu0 0.0
    %918 = vmatpush1.msra.mxu0 0.0
    %919 = vmatprep.subr.mxu0 0.0
    %920 = vmatpush1.msra.mxu0 0.0
    %921 = vmatprep.subr.mxu0 0.0
    %922 = vmatpush1.msra.mxu0 0.0
    %923 = vmatprep.subr.mxu0 0.0
    %924 = vmatpush1.msra.mxu0 0.0
    %925 = vmatprep.subr.mxu0 0.0
    %926 = vmatpush1.msra.mxu0 0.0
    %927 = vmatprep.subr.mxu0 0.0
    %928 = vmatpush1.msra.mxu0 0.0
    %929 = vmatprep.subr.mxu0 0.0
    %930 = vmatpush1.msra.mxu0 0.0
    %931 = vmatprep.subr.mxu0 0.0
    %932 = vmatpush1.msra.mxu0 0.0
    %933 = vmatprep.subr.mxu0 0.0
    %934 = vmatpush1.msra.mxu0 0.0
    %935 = vmatprep.subr.mxu0 0.0
    %936 = vmatpush1.msra.mxu0 0.0
    %937 = vmatprep.subr.mxu0 0.0
    %938 = vmatpush1.msra.mxu0 0.0
    %939 = vmatprep.subr.mxu0 0.0
    %940 = vmatpush1.msra.mxu0 0.0
    %941 = vmatprep.subr.mxu0 0.0
    %942 = vmatpush1.msra.mxu0 0.0
    %943 = vmatprep.subr.mxu0 0.0
    %944 = vmatpush1.msra.mxu0 0.0
    %945 = vmatprep.subr.mxu0 0.0
    %946 = vmatpush1.msra.mxu0 0.0
    %947 = vmatprep.subr.mxu0 0.0
    %948 = vmatpush1.msra.mxu0 0.0
    %949 = vmatprep.mubr.f32.mxu0 0.0
    %950 = vmatmul.mubr.f32.gmra.mrb[0].mxu0 %v883
    %v951 = vpop.f32.mrb[0].mxu0
    %v952 = vadd.f32 0.0, %v951
    %v953 = vpop.f32.mrb[0].mxu0
    %v954 = vadd.f32 0.0, %v953
    %955 = vdwg.mxu0
    %v956 = vlaneseq
    %v957 = vshrl.u32 %v956, 7
    %v958 = vsub.s32 0, %v957
    %v959 = vrot.slane %v952, %v958
    %v960 = vlaneseq
    %v961 = vshrl.u32 %v960, 7
    %v962 = vsub.s32 0, %v961
    %v963 = vrot.slane %v954, %v962
    %v964 = vsub.f32 %v763, %v959
    %v965 = vsub.f32 %v765, %v963
    %v966 = vmul.f32 %v964, %v964
    %v967 = vmul.f32 %v965, %v965
    %968 = vmatprep.subr.mxu0 0.0
    %969 = vmatpush1.msra.mxu0 %v767
    %970 = vmatprep.subr.mxu0 0.0
    %971 = vmatpush1.msra.mxu0 %v768
    %972 = vmatprep.subr.mxu0 0.0
    %973 = vmatpush1.msra.mxu0 %v769
    %974 = vmatprep.subr.mxu0 0.0
    %975 = vmatpush1.msra.mxu0 %v770
    %976 = vmatprep.subr.mxu0 0.0
    %977 = vmatpush1.msra.mxu0 %v771
    %978 = vmatprep.subr.mxu0 0.0
    %979 = vmatpush1.msra.mxu0 %v772
    %980 = vmatprep.subr.mxu0 0.0
    %981 = vmatpush1.msra.mxu0 %v773
    %982 = vmatprep.subr.mxu0 0.0
    %983 = vmatpush1.msra.mxu0 %v774
    %984 = vmatprep.subr.mxu0 0.0
    %985 = vmatpush1.msra.mxu0 %v775
    %986 = vmatprep.subr.mxu0 0.0
    %987 = vmatpush1.msra.mxu0 %v776
    %988 = vmatprep.subr.mxu0 0.0
    %989 = vmatpush1.msra.mxu0 %v777
    %990 = vmatprep.subr.mxu0 0.0
    %991 = vmatpush1.msra.mxu0 %v778
    %992 = vmatprep.subr.mxu0 0.0
    %993 = vmatpush1.msra.mxu0 %v779
    %994 = vmatprep.subr.mxu0 0.0
    %995 = vmatpush1.msra.mxu0 %v780
    %996 = vmatprep.subr.mxu0 0.0
    %997 = vmatpush1.msra.mxu0 %v781
    %998 = vmatprep.subr.mxu0 0.0
    %999 = vmatpush1.msra.mxu0 %v782
    %1000 = vmatprep.subr.mxu0 0.0
    %1001 = vmatpush1.msra.mxu0 %v783
    %1002 = vmatprep.subr.mxu0 0.0
    %1003 = vmatpush1.msra.mxu0 %v784
    %1004 = vmatprep.subr.mxu0 0.0
    %1005 = vmatpush1.msra.mxu0 %v785
    %1006 = vmatprep.subr.mxu0 0.0
    %1007 = vmatpush1.msra.mxu0 %v786
    %1008 = vmatprep.subr.mxu0 0.0
    %1009 = vmatpush1.msra.mxu0 %v787
    %1010 = vmatprep.subr.mxu0 0.0
    %1011 = vmatpush1.msra.mxu0 %v788
    %1012 = vmatprep.subr.mxu0 0.0
    %1013 = vmatpush1.msra.mxu0 %v789
    %1014 = vmatprep.subr.mxu0 0.0
    %1015 = vmatpush1.msra.mxu0 %v790
    %1016 = vmatprep.subr.mxu0 0.0
    %1017 = vmatpush1.msra.mxu0 %v791
    %1018 = vmatprep.subr.mxu0 0.0
    %1019 = vmatpush1.msra.mxu0 %v792
    %1020 = vmatprep.subr.mxu0 0.0
    %1021 = vmatpush1.msra.mxu0 %v793
    %1022 = vmatprep.subr.mxu0 0.0
    %1023 = vmatpush1.msra.mxu0 %v794
    %1024 = vmatprep.subr.mxu0 0.0
    %1025 = vmatpush1.msra.mxu0 %v795
    %1026 = vmatprep.subr.mxu0 0.0
    %1027 = vmatpush1.msra.mxu0 %v796
    %1028 = vmatprep.subr.mxu0 0.0
    %1029 = vmatpush1.msra.mxu0 %v797
    %1030 = vmatprep.subr.mxu0 0.0
    %1031 = vmatpush1.msra.mxu0 %v798
    %1032 = vmatprep.mubr.f32.mxu0 %v967
    %1033 = vmatmul.mubr.f32.gmra.mrb[0].mxu0 %v966
    %v1034 = vpop.f32.mrb[0].mxu0
    %v1035 = vadd.f32 0.0, %v1034
    %v1036 = vpop.f32.mrb[0].mxu0
    %1037 = vdwg.mxu0
    %v1038 = vsel %vm869, %v1035, 0.0
    %v1039 = vrot.slane %v1038, 4
    %v1040 = vadd.f32 %v1038, %v1039
    %v1041 = vrot.slane %v1040, 2
    %v1042 = vadd.f32 %v1040, %v1041
    %v1043 = vrot.slane %v1042, 1
    %v1044 = vadd.f32 %v1042, %v1043
    %v1045 = vmul.f32 %v1044, %v877
    %v1046 = vadd.f32 %v1045, 1e-05
    %v1047 = vrsqrt.pop %v1046
    %v1049 = vsel %vm881, %v1047, 0
    %1051 = vmatprep.subr.mxu0 %v880
    %1052 = vmatpush1.msra.mxu0 %v879
    %1053 = vmatprep.subr.mxu0 0.0
    %1054 = vmatpush1.msra.mxu0 0.0
    %1055 = vmatprep.subr.mxu0 0.0
    %1056 = vmatpush1.msra.mxu0 0.0
    %1057 = vmatprep.subr.mxu0 0.0
    %1058 = vmatpush1.msra.mxu0 0.0
    %1059 = vmatprep.subr.mxu0 0.0
    %1060 = vmatpush1.msra.mxu0 0.0
    %1061 = vmatprep.subr.mxu0 0.0
    %1062 = vmatpush1.msra.mxu0 0.0
    %1063 = vmatprep.subr.mxu0 0.0
    %1064 = vmatpush1.msra.mxu0 0.0
    %1065 = vmatprep.subr.mxu0 0.0
    %1066 = vmatpush1.msra.mxu0 0.0
    %1067 = vmatprep.subr.mxu0 0.0
    %1068 = vmatpush1.msra.mxu0 0.0
    %1069 = vmatprep.subr.mxu0 0.0
    %1070 = vmatpush1.msra.mxu0 0.0
    %1071 = vmatprep.subr.mxu0 0.0
    %1072 = vmatpush1.msra.mxu0 0.0
    %1073 = vmatprep.subr.mxu0 0.0
    %1074 = vmatpush1.msra.mxu0 0.0
    %1075 = vmatprep.subr.mxu0 0.0
    %1076 = vmatpush1.msra.mxu0 0.0
    %1077 = vmatprep.subr.mxu0 0.0
    %1078 = vmatpush1.msra.mxu0 0.0
    %1079 = vmatprep.subr.mxu0 0.0
    %1080 = vmatpush1.msra.mxu0 0.0
    %1081 = vmatprep.subr.mxu0 0.0
    %1082 = vmatpush1.msra.mxu0 0.0
    %1083 = vmatprep.subr.mxu0 0.0
    %1084 = vmatpush1.msra.mxu0 0.0
    %1085 = vmatprep.subr.mxu0 0.0
    %1086 = vmatpush1.msra.mxu0 0.0
    %1087 = vmatprep.subr.mxu0 0.0
    %1088 = vmatpush1.msra.mxu0 0.0
    %1089 = vmatprep.subr.mxu0 0.0
    %1090 = vmatpush1.msra.mxu0 0.0
    %1091 = vmatprep.subr.mxu0 0.0
    %1092 = vmatpush1.msra.mxu0 0.0
    %1093 = vmatprep.subr.mxu0 0.0
    %1094 = vmatpush1.msra.mxu0 0.0
    %1095 = vmatprep.subr.mxu0 0.0
    %1096 = vmatpush1.msra.mxu0 0.0
    %1097 = vmatprep.subr.mxu0 0.0
    %1098 = vmatpush1.msra.mxu0 0.0
    %1099 = vmatprep.subr.mxu0 0.0
    %1100 = vmatpush1.msra.mxu0 0.0
    %1101 = vmatprep.subr.mxu0 0.0
    %1102 = vmatpush1.msra.mxu0 0.0
    %1103 = vmatprep.subr.mxu0 0.0
    %1104 = vmatpush1.msra.mxu0 0.0
    %1105 = vmatprep.subr.mxu0 0.0
    %1106 = vmatpush1.msra.mxu0 0.0
    %1107 = vmatprep.subr.mxu0 0.0
    %1108 = vmatpush1.msra.mxu0 0.0
    %1109 = vmatprep.subr.mxu0 0.0
    %1110 = vmatpush1.msra.mxu0 0.0
    %1111 = vmatprep.subr.mxu0 0.0
    %1112 = vmatpush1.msra.mxu0 0.0
    %1113 = vmatprep.subr.mxu0 0.0
    %1114 = vmatpush1.msra.mxu0 0.0
    %1115 = vmatprep.mubr.f32.mxu0 0.0
    %1116 = vmatmul.mubr.f32.gmra.mrb[0].mxu0 %v1049
    %v1117 = vpop.f32.mrb[0].mxu0
    %v1118 = vadd.f32 0.0, %v1117
    %v1119 = vpop.f32.mrb[0].mxu0
    %v1120 = vadd.f32 0.0, %v1119
    %1121 = vdwg.mxu0
    %v1122 = vlaneseq
    %v1123 = vshrl.u32 %v1122, 7
    %v1124 = vsub.s32 0, %v1123
    %v1125 = vrot.slane %v1118, %v1124
    %v1126 = vlaneseq
    %v1127 = vshrl.u32 %v1126, 7
    %v1128 = vsub.s32 0, %v1127
    %v1129 = vrot.slane %v1120, %v1128
    %v1130 = vmul.f32 %v964, %v1125
    %v1131 = vmul.f32 %v965, %v1129
    %v1132 = vld [vmem:[%s9] sm:$0x3]
    %v1134 = vlaneseq
    %v1135 = vshrl.u32 %v1134, 7
    %v1136 = vsub.s32 0, %v1135
    %v1137 = vrot.slane %v1132, %v1136
    %v1138 = vlaneseq
    %v1139 = vshrl.u32 %v1138, 7
    %v1140 = vsub.s32 1, %v1139
    %v1141 = vrot.slane %v1132, %v1140
    %v1144 = vmul.f32 %v1130, %v1137
    %v1145 = vmul.f32 %v1131, %v1141
    %v1146 = vld [vmem:[%s10] sm:$0x3]
    %v1148 = vlaneseq
    %v1149 = vshrl.u32 %v1148, 7
    %v1150 = vsub.s32 0, %v1149
    %v1151 = vrot.slane %v1146, %v1150
    %v1152 = vlaneseq
    %v1153 = vshrl.u32 %v1152, 7
    %v1154 = vsub.s32 1, %v1153
    %v1155 = vrot.slane %v1146, %v1154
    %v1158 = vadd.f32 %v1144, %v1151
    %v1159 = vadd.f32 %v1145, %v1155
    %v1160 = vmax.f32 %v1158, 0.0
    %v1161 = vmax.f32 %v1159, 0.0
    %v1162 = vld [vmem:[%s13] sm:$0xff]
    %v1163 = vld [vmem:[%s13 + $0x8] sm:$0xff]
    %v1164 = vld [vmem:[%s13 + $0x10] sm:$0xff]
    %v1165 = vld [vmem:[%s13 + $0x18] sm:$0xff]
    %v1166 = vld [vmem:[%s13 + $0x20] sm:$0xff]
    %v1167 = vld [vmem:[%s13 + $0x28] sm:$0xff]
    %v1168 = vld [vmem:[%s13 + $0x30] sm:$0xff]
    %v1169 = vld [vmem:[%s13 + $0x38] sm:$0xff]
    %v1170 = vld [vmem:[%s13 + $0x40] sm:$0xff]
    %v1171 = vld [vmem:[%s13 + $0x48] sm:$0xff]
    %v1172 = vld [vmem:[%s13 + $0x50] sm:$0xff]
    %v1173 = vld [vmem:[%s13 + $0x58] sm:$0xff]
    %v1174 = vld [vmem:[%s13 + $0x60] sm:$0xff]
    %v1175 = vld [vmem:[%s13 + $0x68] sm:$0xff]
    %v1176 = vld [vmem:[%s13 + $0x70] sm:$0xff]
    %v1177 = vld [vmem:[%s13 + $0x78] sm:$0xff]
    %v1178 = vld [vmem:[%s13 + $0x80] sm:$0xff]
    %v1179 = vld [vmem:[%s13 + $0x88] sm:$0xff]
    %v1180 = vld [vmem:[%s13 + $0x90] sm:$0xff]
    %v1181 = vld [vmem:[%s13 + $0x98] sm:$0xff]
    %v1182 = vld [vmem:[%s13 + $0xa0] sm:$0xff]
    %v1183 = vld [vmem:[%s13 + $0xa8] sm:$0xff]
    %v1184 = vld [vmem:[%s13 + $0xb0] sm:$0xff]
    %v1185 = vld [vmem:[%s13 + $0xb8] sm:$0xff]
    %v1186 = vld [vmem:[%s13 + $0xc0] sm:$0xff]
    %v1187 = vld [vmem:[%s13 + $0xc8] sm:$0xff]
    %v1188 = vld [vmem:[%s13 + $0xd0] sm:$0xff]
    %v1189 = vld [vmem:[%s13 + $0xd8] sm:$0xff]
    %v1190 = vld [vmem:[%s13 + $0xe0] sm:$0xff]
    %v1191 = vld [vmem:[%s13 + $0xe8] sm:$0xff]
    %v1192 = vld [vmem:[%s13 + $0xf0] sm:$0xff]
    %v1193 = vld [vmem:[%s13 + $0xf8] sm:$0xff]
    %v1194 = vld [vmem:[%s14] sm:$0x1]
    %v1196 = vlaneseq
    %v1197 = vshrl.u32 %v1196, 7
    %v1198 = vsub.s32 0, %v1197
    %v1199 = vrot.slane %v1194, %v1198
    %1201 = vmatprep.subr.mxu0 0.0
    %1202 = vmatpush1.msra.mxu0 %v1162
    %1203 = vmatprep.subr.mxu0 0.0
    %1204 = vmatpush1.msra.mxu0 %v1163
    %1205 = vmatprep.subr.mxu0 0.0
    %1206 = vmatpush1.msra.mxu0 %v1164
    %1207 = vmatprep.subr.mxu0 0.0
    %1208 = vmatpush1.msra.mxu0 %v1165
    %1209 = vmatprep.subr.mxu0 0.0
    %1210 = vmatpush1.msra.mxu0 %v1166
    %1211 = vmatprep.subr.mxu0 0.0
    %1212 = vmatpush1.msra.mxu0 %v1167
    %1213 = vmatprep.subr.mxu0 0.0
    %1214 = vmatpush1.msra.mxu0 %v1168
    %1215 = vmatprep.subr.mxu0 0.0
    %1216 = vmatpush1.msra.mxu0 %v1169
    %1217 = vmatprep.subr.mxu0 0.0
    %1218 = vmatpush1.msra.mxu0 %v1170
    %1219 = vmatprep.subr.mxu0 0.0
    %1220 = vmatpush1.msra.mxu0 %v1171
    %1221 = vmatprep.subr.mxu0 0.0
    %1222 = vmatpush1.msra.mxu0 %v1172
    %1223 = vmatprep.subr.mxu0 0.0
    %1224 = vmatpush1.msra.mxu0 %v1173
    %1225 = vmatprep.subr.mxu0 0.0
    %1226 = vmatpush1.msra.mxu0 %v1174
    %1227 = vmatprep.subr.mxu0 0.0
    %1228 = vmatpush1.msra.mxu0 %v1175
    %1229 = vmatprep.subr.mxu0 0.0
    %1230 = vmatpush1.msra.mxu0 %v1176
    %1231 = vmatprep.subr.mxu0 0.0
    %1232 = vmatpush1.msra.mxu0 %v1177
    %1233 = vmatprep.subr.mxu0 0.0
    %1234 = vmatpush1.msra.mxu0 %v1178
    %1235 = vmatprep.subr.mxu0 0.0
    %1236 = vmatpush1.msra.mxu0 %v1179
    %1237 = vmatprep.subr.mxu0 0.0
    %1238 = vmatpush1.msra.mxu0 %v1180
    %1239 = vmatprep.subr.mxu0 0.0
    %1240 = vmatpush1.msra.mxu0 %v1181
    %1241 = vmatprep.subr.mxu0 0.0
    %1242 = vmatpush1.msra.mxu0 %v1182
    %1243 = vmatprep.subr.mxu0 0.0
    %1244 = vmatpush1.msra.mxu0 %v1183
    %1245 = vmatprep.subr.mxu0 0.0
    %1246 = vmatpush1.msra.mxu0 %v1184
    %1247 = vmatprep.subr.mxu0 0.0
    %1248 = vmatpush1.msra.mxu0 %v1185
    %1249 = vmatprep.subr.mxu0 0.0
    %1250 = vmatpush1.msra.mxu0 %v1186
    %1251 = vmatprep.subr.mxu0 0.0
    %1252 = vmatpush1.msra.mxu0 %v1187
    %1253 = vmatprep.subr.mxu0 0.0
    %1254 = vmatpush1.msra.mxu0 %v1188
    %1255 = vmatprep.subr.mxu0 0.0
    %1256 = vmatpush1.msra.mxu0 %v1189
    %1257 = vmatprep.subr.mxu0 0.0
    %1258 = vmatpush1.msra.mxu0 %v1190
    %1259 = vmatprep.subr.mxu0 0.0
    %1260 = vmatpush1.msra.mxu0 %v1191
    %1261 = vmatprep.subr.mxu0 0.0
    %1262 = vmatpush1.msra.mxu0 %v1192
    %1263 = vmatprep.subr.mxu0 0.0
    %1264 = vmatpush1.msra.mxu0 %v1193
    %1265 = vmatprep.mubr.f32.mxu0 %v1161
    %1266 = vmatmul.mubr.f32.gmra.mrb[0].mxu0 %v1160
    %v1267 = vpop.f32.mrb[0].mxu0
    %v1268 = vadd.f32 %v1199, %v1267
    %v1269 = vpop.f32.mrb[0].mxu0
    %1270 = vdwg.mxu0
    %1271 = vst.msk [vmem:[%s15] sm:$0x3] %vm869, %v1268
    %1273 = vrot.lane.b32.xlu0 %v1268, 123
    %v1274 = vpop.permute.xlu0 %1273
    %s1276 = scalar_lea.vmem %s15, 2
    %1277 = vst.msk [vmem:[%s1276] sm:$0x3] %vm869, %v1274
    %1278 = vrot.lane.b32.xlu0 %v1268, 118
    %v1279 = vpop.permute.xlu0 %1278
    %s1281 = scalar_lea.vmem %s15, 4
    %1282 = vst.msk [vmem:[%s1281] sm:$0x3] %vm869, %v1279
    %1283 = vrot.lane.b32.xlu0 %v1268, 112
    %v1284 = vpop.permute.xlu0 %1283
    %s1286 = scalar_lea.vmem %s15, 6
    %1287 = vst.msk [vmem:[%s1286] sm:$0x3] %vm869, %v1284
    %1288 = vrot.lane.b32.xlu0 %v1268, 107
    %v1289 = vpop.permute.xlu0 %1288
    %s1291 = scalar_lea.vmem %s15, 8
    %1292 = vst.msk [vmem:[%s1291] sm:$0x3] %vm869, %v1289
    %1293 = vrot.lane.b32.xlu0 %v1268, 101
    %v1294 = vpop.permute.xlu0 %1293
    %s1296 = scalar_lea.vmem %s15, 10
    %1297 = vst.msk [vmem:[%s1296] sm:$0x3] %vm869, %v1294
    %1298 = vrot.lane.b32.xlu0 %v1268, 96
    %v1299 = vpop.permute.xlu0 %1298
    %s1301 = scalar_lea.vmem %s15, 12
    %1302 = vst.msk [vmem:[%s1301] sm:$0x3] %vm869, %v1299
    %1303 = vrot.lane.b32.xlu0 %v1268, 90
    %v1304 = vpop.permute.xlu0 %1303
    %s1306 = scalar_lea.vmem %s15, 14
    %1307 = vst.msk [vmem:[%s1306] sm:$0x3] %vm869, %v1304
    %1308 = vrot.lane.b32.xlu0 %v1268, 85
    %v1309 = vpop.permute.xlu0 %1308
    %s1311 = scalar_lea.vmem %s15, 16
    %1312 = vst.msk [vmem:[%s1311] sm:$0x3] %vm869, %v1309
    %1313 = vrot.lane.b32.xlu0 %v1268, 79
    %v1314 = vpop.permute.xlu0 %1313
    %s1316 = scalar_lea.vmem %s15, 18
    %1317 = vst.msk [vmem:[%s1316] sm:$0x3] %vm869, %v1314
    %1318 = vrot.lane.b32.xlu0 %v1268, 74
    %v1319 = vpop.permute.xlu0 %1318
    %s1321 = scalar_lea.vmem %s15, 20
    %1322 = vst.msk [vmem:[%s1321] sm:$0x3] %vm869, %v1319
    %1323 = vrot.lane.b32.xlu0 %v1268, 72
    %v1324 = vpop.permute.xlu0 %1323
    %s1326 = scalar_lea.vmem %s15, 22
    %1327 = vst.msk [vmem:[%s1326] sm:$0x3] %vm869, %v1324
    // Predicated region
    $region66: #{tpu_custom_call.1} parent=1 // pred_check
      _
    $region67: #{tpu_custom_call.1} parent=1 // pred_check_branch
      %1329 = sbr.rel (0) target = $region69
    $region68: #{tpu_custom_call.1} parent=1 // pred_region
      _
    $region69: #{tpu_custom_call.1} parent=1 // pred_fallthru
      _
    // Predicated region
    $region70: #{tpu_custom_call.1} parent=1 // pred_check
      _
    $region71: #{tpu_custom_call.1} parent=1 // pred_check_branch
      %1331 = sbr.rel (0) target = $region73
    $region72: #{tpu_custom_call.1} parent=1 // pred_region
      _
    $region73: #{tpu_custom_call.1} parent=1 // pred_fallthru
      _
    %1332 = vsyncpa [#allocation3], 1

</llo_original>
